<compile_context>
chip_gen: v7x
topology: tpu7x:2x2x1
jax: 0.10.0
libtpu: 0.0.40
codegen_flags: <defaults>
</compile_context>

<pallas_src>
import functools

import jax
import jax.numpy as jnp
from jax import lax
from jax.experimental import pallas as pl
from jax.experimental.pallas import tpu as pltpu


VMEM_LIMIT_BYTES = 32 * 1024 * 1024     # ample headroom under v7x's 64 MiB/TC
ONEPASS_MAX_KV = 1024                   # one-shot softmax whenever KV fits one tile


def _pick_tile(dim, candidates, min_grid=1):
    """Largest candidate dividing `dim` whose grid extent is >= min_grid,
    else the largest dividing candidate, else the full dim (always legal)."""
    best = None
    for c in candidates:
        if dim % c == 0:
            if best is None:
                best = c
            if dim // c >= min_grid:
                return c
    return best if best is not None else dim


# ----------------------------- tiled linear (+bias, +gelu, +residual) ------------

def _matmul_epilogue(y, bias_ref, res_ref, act):
    y = y + bias_ref[...].astype(jnp.float32)
    if act == "gelu":
        # nn.GELU() default is the exact (erf) form.
        y = jax.nn.gelu(y, approximate=False)
    if res_ref is not None:
        y = y + res_ref[...].astype(jnp.float32)
    return y


def _linear_kernel(x_ref, w_ref, bias_ref, o_ref, acc_ref, *, act):
    k = pl.program_id(2)

    @pl.when(k == 0)
    def _():
        acc_ref[...] = jnp.zeros_like(acc_ref)

    acc_ref[...] += jnp.dot(x_ref[...], w_ref[...],
                            preferred_element_type=jnp.float32)

    @pl.when(k == pl.num_programs(2) - 1)
    def _():
        o_ref[...] = _matmul_epilogue(acc_ref[...], bias_ref, None, act).astype(o_ref.dtype)


def _linear_res_kernel(x_ref, w_ref, bias_ref, res_ref, o_ref, acc_ref, *, act):
    k = pl.program_id(2)

    @pl.when(k == 0)
    def _():
        acc_ref[...] = jnp.zeros_like(acc_ref)

    acc_ref[...] += jnp.dot(x_ref[...], w_ref[...],
                            preferred_element_type=jnp.float32)

    @pl.when(k == pl.num_programs(2) - 1)
    def _():
        o_ref[...] = _matmul_epilogue(acc_ref[...], bias_ref, res_ref, act).astype(o_ref.dtype)


def pallas_linear(x, w, b, act=None, residual=None, residual_row_period=None):
    """y = act(x @ w + b) (+ residual).  Tiled, pipelined MXU matmul.

    If residual_row_period is given, `residual` has shape (period, N) and is
    re-used (broadcast) every `period` rows of the output (pos_embed fusion)."""
    M, K = x.shape
    Kw, N = w.shape
    assert K == Kw
    if residual_row_period is not None:
        assert residual is not None and M % residual_row_period == 0
        tm = _pick_tile(residual_row_period, (256, 128, 64, 32, 16), min_grid=1)
    else:
        # min_grid=2 keeps an even parallel extent so v7x's 2 TCs share the work.
        tm = _pick_tile(M, (256, 128, 64, 32, 16), min_grid=2)
    tn = _pick_tile(N, (256, 128), min_grid=2)
    tk = _pick_tile(K, (512, 256, 128), min_grid=1)
    grid = (M // tm, N // tn, K // tk)

    in_specs = [
        pl.BlockSpec((tm, tk), lambda i, j, k: (i, k)),
        pl.BlockSpec((tk, tn), lambda i, j, k: (k, j)),
        pl.BlockSpec((1, tn), lambda i, j, k: (0, j)),
    ]
    args = [x, w, b.reshape(1, N)]
    if residual is None:
        kernel = functools.partial(_linear_kernel, act=act)
    else:
        if residual_row_period is None:
            res_map = lambda i, j, k: (i, j)
        else:
            n_pb = residual_row_period // tm
            res_map = lambda i, j, k: (i % n_pb, j)
        # NOTE: the residual is only read at the last k step; its DMA is elided on
        # revisit (block index is k-independent).  pl.Buffered(1) could drop the
        # second buffer, but it is negligible at these tile sizes.
        in_specs.append(pl.BlockSpec((tm, tn), res_map))
        args.append(residual)
        kernel = functools.partial(_linear_res_kernel, act=act)

    return pl.pallas_call(
        kernel,
        out_shape=jax.ShapeDtypeStruct((M, N), x.dtype),
        grid=grid,
        in_specs=in_specs,
        out_specs=pl.BlockSpec((tm, tn), lambda i, j, k: (i, j)),
        scratch_shapes=[pltpu.VMEM((tm, tn), jnp.float32)],
        compiler_params=pltpu.CompilerParams(
            dimension_semantics=("parallel", "parallel", "arbitrary"),
            vmem_limit_bytes=VMEM_LIMIT_BYTES),
    )(*args)


# ----------------------------- fused LayerNorm + linear ---------------------------

def _ln_linear_kernel(x_ref, g_ref, b_ref, w_ref, bias_ref, o_ref, xn_ref, *, act, eps):
    # LN of the (tm, K) row tile is computed once per row tile (at j == 0) and
    # cached in VMEM; the j (output-column) axis only re-runs the matmul.
    @pl.when(pl.program_id(1) == 0)
    def _():
        x = x_ref[...].astype(jnp.float32)
        mean = jnp.mean(x, axis=-1, keepdims=True)
        var = jnp.mean(jnp.square(x - mean), axis=-1, keepdims=True)
        xn = (x - mean) * lax.rsqrt(var + eps)
        xn = xn * g_ref[...].astype(jnp.float32) + b_ref[...].astype(jnp.float32)
        xn_ref[...] = xn.astype(xn_ref.dtype)

    y = jnp.dot(xn_ref[...], w_ref[...], preferred_element_type=jnp.float32)
    y = y + bias_ref[...].astype(jnp.float32)
    if act == "gelu":
        y = jax.nn.gelu(y, approximate=False)
    o_ref[...] = y.astype(o_ref.dtype)


def pallas_ln_linear(x, gamma, beta, w, b, act=None):
    """y = act(LayerNorm(x) @ w + b).  LN fused (and cached) into the matmul."""
    M, K = x.shape
    Kw, N = w.shape
    assert K == Kw
    tm = _pick_tile(M, (256, 128, 64, 32, 16), min_grid=2)
    tn = _pick_tile(N, (256, 128), min_grid=2)
    grid = (M // tm, N // tn)
    return pl.pallas_call(
        functools.partial(_ln_linear_kernel, act=act, eps=1e-5),   # PyTorch LN eps
        out_shape=jax.ShapeDtypeStruct((M, N), x.dtype),
        grid=grid,
        in_specs=[
            pl.BlockSpec((tm, K), lambda i, j: (i, 0)),
            pl.BlockSpec((1, K), lambda i, j: (0, 0)),
            pl.BlockSpec((1, K), lambda i, j: (0, 0)),
            pl.BlockSpec((K, tn), lambda i, j: (0, j)),
            pl.BlockSpec((1, tn), lambda i, j: (0, j)),
        ],
        out_specs=pl.BlockSpec((tm, tn), lambda i, j: (i, j)),
        scratch_shapes=[pltpu.VMEM((tm, K), x.dtype)],
        compiler_params=pltpu.CompilerParams(
            # j must stay sequential (per-core) so the cached LN tile is valid.
            dimension_semantics=("parallel", "arbitrary"),
            vmem_limit_bytes=VMEM_LIMIT_BYTES),
    )(x, gamma.reshape(1, K), beta.reshape(1, K), w, b.reshape(1, N))


# ----------------------------- attention ------------------------------------------

def _attn_onepass_kernel(q_ref, k_ref, v_ref, o_ref, *, G, hd, scale):
    """Whole KV in one tile: plain softmax, no online-softmax machinery."""
    q = q_ref[0]          # (tq,  G*hd)  lane-dense packed heads
    k = k_ref[0]          # (skv, G*hd)
    v = v_ref[0]          # (skv, G*hd)
    outs = []
    for h in range(G):    # static, small (typically 1-2)
        sl = slice(h * hd, (h + 1) * hd)
        s = lax.dot_general(q[:, sl], k[:, sl], (((1,), (1,)), ((), ())),
                            preferred_element_type=jnp.float32) * scale    # (tq, skv)
        s = s - jnp.max(s, axis=-1, keepdims=True)
        p = jnp.exp(s)
        denom = jnp.sum(p, axis=-1, keepdims=True)
        o_h = lax.dot_general(p.astype(v.dtype), v[:, sl], (((1,), (0,)), ((), ())),
                              preferred_element_type=jnp.float32)          # (tq, hd)
        outs.append(o_h / denom)                                           # exact div
    out = outs[0] if G == 1 else jnp.concatenate(outs, axis=-1)
    o_ref[0] = out.astype(o_ref.dtype)                                     # one full-width store


def _flash_attn_kernel(q_ref, k_ref, v_ref, o_ref, m_ref, l_ref, acc_ref, *,
                       G, hd, scale):
    """Online-softmax path for long sequences.  m/l are (tq, 1) per head
    (scratch (tq, G)); all scratch updates are single full-width stores."""
    kv = pl.program_id(3)

    @pl.when(kv == 0)
    def _():
        m_ref[...] = jnp.full_like(m_ref, -jnp.inf)
        l_ref[...] = jnp.zeros_like(l_ref)
        acc_ref[...] = jnp.zeros_like(acc_ref)

    q = q_ref[0]          # (tq,  G*hd)
    k = k_ref[0]          # (tkv, G*hd)
    v = v_ref[0]
    m_prev = m_ref[...]   # (tq, G)
    l_prev = l_ref[...]   # (tq, G)

    m_cols, l_cols, alpha_cols, pv_cols = [], [], [], []
    for h in range(G):    # static, small
        sl = slice(h * hd, (h + 1) * hd)
        s = lax.dot_general(q[:, sl], k[:, sl], (((1,), (1,)), ((), ())),
                            preferred_element_type=jnp.float32) * scale    # (tq, tkv)
        m_h_prev = m_prev[:, h:h + 1]                                      # (tq, 1)
        m_h = jnp.maximum(m_h_prev, jnp.max(s, axis=-1, keepdims=True))
        alpha = jnp.exp(m_h_prev - m_h)                                    # (tq, 1) exp only
        p = jnp.exp(s - m_h)                                               # (tq, tkv)
        l_h = alpha * l_prev[:, h:h + 1] + jnp.sum(p, axis=-1, keepdims=True)
        pv = lax.dot_general(p.astype(v.dtype), v[:, sl], (((1,), (0,)), ((), ())),
                             preferred_element_type=jnp.float32)           # (tq, hd)
        m_cols.append(m_h)
        l_cols.append(l_h)
        alpha_cols.append(jnp.broadcast_to(alpha, (alpha.shape[0], hd)))
        pv_cols.append(pv)

    m_ref[...] = m_cols[0] if G == 1 else jnp.concatenate(m_cols, axis=-1)
    l_ref[...] = l_cols[0] if G == 1 else jnp.concatenate(l_cols, axis=-1)
    alpha_full = alpha_cols[0] if G == 1 else jnp.concatenate(alpha_cols, axis=-1)
    pv_full = pv_cols[0] if G == 1 else jnp.concatenate(pv_cols, axis=-1)
    acc_ref[...] = alpha_full * acc_ref[...] + pv_full                     # full-width store

    @pl.when(kv == pl.num_programs(3) - 1)
    def _():
        inv = 1.0 / l_ref[...]                                             # (tq, G) exact
        inv_full = (inv if G == 1 else jnp.concatenate(
            [jnp.broadcast_to(inv[:, h:h + 1], (inv.shape[0], hd)) for h in range(G)],
            axis=-1))
        if G == 1:
            inv_full = jnp.broadcast_to(inv, (inv.shape[0], hd))
        o_ref[0] = (acc_ref[...] * inv_full).astype(o_ref.dtype)


def pallas_flash_attention(qkv, batch, seq, num_heads, head_dim,
                           *, onepass_max_kv=ONEPASS_MAX_KV, kv_tile=None):
    """qkv: (batch*seq, 3*num_heads*head_dim), last dim packed as (3, head, head_dim)
    (PyTorch qkv-Linear reshape order).  Returns (batch, seq, C) with heads packed
    head-major along C (the layout proj consumes)."""
    C = num_heads * head_dim
    qkv3 = qkv.reshape(batch, seq, 3 * C)              # contiguous -> free

    # Lane-dense head grouping: G heads per grid step so G*head_dim >= 128 if possible.
    # TODO(synk): a batched dot_general over the G heads could feed the MXU better for
    #             head_dim < 128; kept as a static per-head loop to avoid in-kernel
    #             lane-dim relayouts.
    G = 1
    while G * head_dim < 128 and num_heads % (G * 2) == 0:
        G *= 2
    ng = num_heads // G
    gw = G * head_dim
    tq = _pick_tile(seq, (256, 128, 64, 32, 16), min_grid=1)
    scale = float(head_dim) ** -0.5

    if kv_tile is None and seq <= onepass_max_kv:
        # Fast path: whole KV in one tile -> one-shot softmax, no scratch.
        grid = (batch, ng, seq // tq)
        return pl.pallas_call(
            functools.partial(_attn_onepass_kernel, G=G, hd=head_dim, scale=scale),
            out_shape=jax.ShapeDtypeStruct((batch, seq, C), qkv.dtype),
            grid=grid,
            in_specs=[
                pl.BlockSpec((1, tq, gw), lambda b, g, qi: (b, qi, g)),
                pl.BlockSpec((1, seq, gw), lambda b, g, qi: (b, 0, ng + g)),
                pl.BlockSpec((1, seq, gw), lambda b, g, qi: (b, 0, 2 * ng + g)),
            ],
            out_specs=pl.BlockSpec((1, tq, gw), lambda b, g, qi: (b, qi, g)),
            compiler_params=pltpu.CompilerParams(
                dimension_semantics=("parallel", "parallel", "parallel"),
                vmem_limit_bytes=VMEM_LIMIT_BYTES),
        )(qkv3, qkv3, qkv3)

    # General online-softmax path (large seq); kv tiles >= 256 when seq allows.
    tkv = kv_tile if kv_tile is not None else _pick_tile(
        seq, (512, 256, 128, 64, 32, 16), min_grid=1)
    assert seq % tkv == 0
    grid = (batch, ng, seq // tq, seq // tkv)
    return pl.pallas_call(
        functools.partial(_flash_attn_kernel, G=G, hd=head_dim, scale=scale),
        out_shape=jax.ShapeDtypeStruct((batch, seq, C), qkv.dtype),
        grid=grid,
        in_specs=[
            pl.BlockSpec((1, tq, gw), lambda b, g, qi, ki: (b, qi, g)),
            pl.BlockSpec((1, tkv, gw), lambda b, g, qi, ki: (b, ki, ng + g)),
            pl.BlockSpec((1, tkv, gw), lambda b, g, qi, ki: (b, ki, 2 * ng + g)),
        ],
        out_specs=pl.BlockSpec((1, tq, gw), lambda b, g, qi, ki: (b, qi, g)),
        scratch_shapes=[
            pltpu.VMEM((tq, G), jnp.float32),    # running max, (tq,1) per head
            pltpu.VMEM((tq, G), jnp.float32),    # running denom
            pltpu.VMEM((tq, gw), jnp.float32),   # output accumulator
        ],
        compiler_params=pltpu.CompilerParams(
            dimension_semantics=("parallel", "parallel", "parallel", "arbitrary"),
            vmem_limit_bytes=VMEM_LIMIT_BYTES),
    )(qkv3, qkv3, qkv3)


def _attention_reference(qkv, batch, seq, num_heads, head_dim):
    """Pure-JAX reference of the packed-qkv attention, for self-checking."""
    C = num_heads * head_dim
    qkv5 = qkv.astype(jnp.float32).reshape(batch, seq, 3, num_heads, head_dim)
    q = qkv5[:, :, 0].transpose(0, 2, 1, 3)
    k = qkv5[:, :, 1].transpose(0, 2, 1, 3)
    v = qkv5[:, :, 2].transpose(0, 2, 1, 3)
    s = jnp.einsum("bhqd,bhkd->bhqk", q, k) * (float(head_dim) ** -0.5)
    p = jax.nn.softmax(s, axis=-1)
    o = jnp.einsum("bhqk,bhkd->bhqd", p, v)
    return o.transpose(0, 2, 1, 3).reshape(batch, seq, C)


# ----------------------------- model (thin JAX glue) --------------------------------

def block_forward(bp, x, batch, seq, num_heads):
    """Transformer block, global-attention path.  x: (batch*seq, C)."""
    C = x.shape[-1]
    head_dim = C // num_heads
    # Attention: LN1 fused into the qkv matmul; shortcut fused into proj's epilogue.
    qkv = pallas_ln_linear(x, bp["ln1_g"], bp["ln1_b"], bp["qkv_w"], bp["qkv_b"])
    attn = pallas_flash_attention(qkv, batch, seq, num_heads, head_dim)
    attn = attn.reshape(batch * seq, C)
    x = pallas_linear(attn, bp["proj_w"], bp["proj_b"], residual=x)
    # MLP: LN2 fused into lin1 (+exact GELU); residual fused into lin2's epilogue.
    h = pallas_ln_linear(x, bp["ln2_g"], bp["ln2_b"], bp["mlp_w1"], bp["mlp_b1"],
                         act="gelu")
    # TODO(synk): feature_moe (MoE class) is not defined in the reference source;
    #             the x_moe additive term is omitted.
    x = pallas_linear(h, bp["mlp_w2"], bp["mlp_b2"], residual=x)
    return x


def adaifl_forward(params, x_nchw, *, patch_size, num_heads, global_attn_indexes):
    B, Cin, Himg, Wimg = x_nchw.shape
    Hp, Wp = Himg // patch_size, Wimg // patch_size
    seq = Hp * Wp
    D = params["patch_w"].shape[1]
    dtype = params["patch_w"].dtype
    # PatchEmbed: stride==kernel Conv2d -> patchify + matmul ((c, kh, kw) flatten order
    # matches the PyTorch conv-weight flatten).
    xp = (x_nchw.astype(dtype)
          .reshape(B, Cin, Hp, patch_size, Wp, patch_size)
          .transpose(0, 2, 4, 1, 3, 5)
          .reshape(B * seq, Cin * patch_size * patch_size))
    # use_abs_pos=True: pos_embed add fused into the patch-embed matmul epilogue
    # (periodic residual: same (seq, D) block for every batch element).
    pos = params["pos_embed"].reshape(seq, D)
    x = pallas_linear(xp, params["patch_w"], params["patch_b"],
                      residual=pos, residual_row_period=seq)                # (B*seq, D)
    # score_pred / R1/R2/R3_scale_pred are only consumed by the FIA path, which is never
    # taken when every block index is in global_attn_indexes.
    stage_features = []
    for i, bp in enumerate(params["blocks"]):
        x = block_forward(bp, x, B, seq, num_heads)
        if i in global_attn_indexes:
            stage_features.append(x.reshape(B, Hp, Wp, D).transpose(0, 3, 1, 2))  # NCHW
    # TODO(synk): Decoder class is not defined in the reference source; return the
    #             collected stage features instead of mask_pred.
    return stage_features


def init_params(key, *, img_size, patch_size, in_chans, embed_dim, depth, mlp_ratio,
                dtype=jnp.bfloat16):
    Hp = img_size // patch_size
    mlp_dim = int(embed_dim * mlp_ratio)
    keys = jax.random.split(key, 2 + depth)

    def winit(k, shape, scale=0.02):
        return (scale * jax.random.normal(k, shape, jnp.float32)).astype(dtype)

    params = {
        "patch_w": winit(keys[0], (in_chans * patch_size * patch_size, embed_dim)),
        "patch_b": jnp.zeros((embed_dim,), dtype),
        "pos_embed": winit(keys[1], (1, Hp, Hp, embed_dim)),
        "blocks": [],
    }
    for i in range(depth):
        bk = jax.random.split(keys[2 + i], 4)
        params["blocks"].append(dict(
            ln1_g=jnp.ones((embed_dim,), dtype),
            ln1_b=jnp.zeros((embed_dim,), dtype),
            qkv_w=winit(bk[0], (embed_dim, 3 * embed_dim)),
            qkv_b=jnp.zeros((3 * embed_dim,), dtype),
            proj_w=winit(bk[1], (embed_dim, embed_dim)),
            proj_b=jnp.zeros((embed_dim,), dtype),
            ln2_g=jnp.ones((embed_dim,), dtype),
            ln2_b=jnp.zeros((embed_dim,), dtype),
            mlp_w1=winit(bk[2], (embed_dim, mlp_dim)),
            mlp_b1=jnp.zeros((mlp_dim,), dtype),
            mlp_w2=winit(bk[3], (mlp_dim, embed_dim)),
            mlp_b2=jnp.zeros((embed_dim,), dtype),
        ))
    return params


if __name__ == "__main__":
    # Small but lane-friendly configuration (embed_dim=256, head_dim=64).
    B, in_chans, img_size, patch_size = 2, 3, 128, 16
    embed_dim, depth, num_heads, mlp_ratio = 256, 2, 4, 4.0
    global_attn_indexes = (0, 1)   # every block uses the (provided) global Attention path

    key = jax.random.PRNGKey(0)
    kp, kx, ka = jax.random.split(key, 3)
    params = init_params(kp, img_size=img_size, patch_size=patch_size,
                         in_chans=in_chans, embed_dim=embed_dim,
                         depth=depth, mlp_ratio=mlp_ratio)
    x = jax.random.normal(kx, (B, in_chans, img_size, img_size), jnp.float32)

    # --- attention self-check: both the one-pass and the online-softmax paths ---
    tb, ts, th, thd = 1, 128, 4, 64
    qkv_t = (0.5 * jax.random.normal(ka, (tb * ts, 3 * th * thd), jnp.float32)
             ).astype(jnp.bfloat16)
    ref = _attention_reference(qkv_t, tb, ts, th, thd)
    fast = jax.block_until_ready(pallas_flash_attention(qkv_t, tb, ts, th, thd))
    online = jax.block_until_ready(
        pallas_flash_attention(qkv_t, tb, ts, th, thd, onepass_max_kv=0, kv_tile=64))
    for got in (fast, online):
        err = float(jnp.max(jnp.abs(got.astype(jnp.float32) - ref)))
        assert err < 5e-2, f"attention mismatch vs reference: max abs err {err}"

    # --- full forward ---
    fwd = jax.jit(functools.partial(
        adaifl_forward, patch_size=patch_size, num_heads=num_heads,
        global_attn_indexes=global_attn_indexes))
    feats = jax.block_until_ready(fwd(params, x))

    Hp = img_size // patch_size
    expected = (B, embed_dim, Hp, Hp)
    assert all(f.shape == expected for f in feats), [f.shape for f in feats]
    assert all(bool(jnp.all(jnp.isfinite(f.astype(jnp.float32)))) for f in feats)
    print("KERNEL_OK")
</pallas_src>

<mosaic_0001>
module attributes {stable_mosaic.version = 11 : i64} {
  func.func @_attn_onepass_kernel(%arg0: i32, %arg1: i32, %arg2: i32, %arg3: memref<1x128x128xbf16, #tpu.memory_space<vmem>>, %arg4: memref<1x128x128xbf16, #tpu.memory_space<vmem>>, %arg5: memref<1x128x128xbf16, #tpu.memory_space<vmem>>, %arg6: memref<1x128x128xbf16, #tpu.memory_space<vmem>>) attributes {dimension_semantics = [#tpu.dimension_semantics<parallel>, #tpu.dimension_semantics<parallel>, #tpu.dimension_semantics<parallel>], iteration_bounds = array<i64: 1, 2, 1>, scalar_prefetch = 0 : i64, scratch_operands = 0 : i64, tpu.core_type = #tpu.core_type<tc>, window_params = [{transform_indices = @transform_0, window_bounds = array<i64: 1, 128, 128>}, {transform_indices = @transform_1, window_bounds = array<i64: 1, 128, 128>}, {transform_indices = @transform_2, window_bounds = array<i64: 1, 128, 128>}, {transform_indices = @transform_3, window_bounds = array<i64: 1, 128, 128>}]} {
    %c0 = arith.constant 0 : index
    %c0_0 = arith.constant 0 : index
    %c0_1 = arith.constant 0 : index
    %0 = vector.load %arg3[%c0, %c0_0, %c0_1] : memref<1x128x128xbf16, #tpu.memory_space<vmem>>, vector<1x128x128xbf16>
    %1 = vector.shape_cast %0 : vector<1x128x128xbf16> to vector<128x128xbf16>
    %c0_2 = arith.constant 0 : index
    %c0_3 = arith.constant 0 : index
    %c0_4 = arith.constant 0 : index
    %2 = vector.load %arg4[%c0_2, %c0_3, %c0_4] : memref<1x128x128xbf16, #tpu.memory_space<vmem>>, vector<1x128x128xbf16>
    %3 = vector.shape_cast %2 : vector<1x128x128xbf16> to vector<128x128xbf16>
    %c0_5 = arith.constant 0 : index
    %c0_6 = arith.constant 0 : index
    %c0_7 = arith.constant 0 : index
    %4 = vector.load %arg5[%c0_5, %c0_6, %c0_7] : memref<1x128x128xbf16, #tpu.memory_space<vmem>>, vector<1x128x128xbf16>
    %5 = vector.shape_cast %4 : vector<1x128x128xbf16> to vector<128x128xbf16>
    %6 = vector.extract_strided_slice %1 {offsets = [0, 0], sizes = [128, 64], strides = [1, 1]} : vector<128x128xbf16> to vector<128x64xbf16>
    %7 = vector.extract_strided_slice %3 {offsets = [0, 0], sizes = [128, 64], strides = [1, 1]} : vector<128x128xbf16> to vector<128x64xbf16>
    %cst = arith.constant dense<0.000000e+00> : vector<128x128xf32>
    %8 = tpu.matmul %6, %7, %cst {dimension_numbers = #tpu.dot_dimension_numbers<[1], [1], [0], [0], [0, 0, 1, 0], [], []>} : vector<128x64xbf16>, vector<128x64xbf16>, vector<128x128xf32> -> vector<128x128xf32>
    %cst_8 = arith.constant 1.250000e-01 : f32
    %9 = vector.broadcast %cst_8 : f32 to vector<128x128xf32>
    %10 = arith.mulf %8, %9 : vector<128x128xf32>
    %cst_9 = arith.constant dense<0xFF800000> : vector<128xf32>
    %11 = vector.multi_reduction <maximumf>, %10, %cst_9 [1] : vector<128x128xf32> to vector<128xf32>
    %12 = vector.shape_cast %11 : vector<128xf32> to vector<128x1xf32>
    %13 = vector.broadcast %12 : vector<128x1xf32> to vector<128x128xf32>
    %14 = arith.subf %10, %13 : vector<128x128xf32>
    %15 = math.exp %14 : vector<128x128xf32>
    %cst_10 = arith.constant dense<0.000000e+00> : vector<128xf32>
    %16 = vector.multi_reduction <add>, %15, %cst_10 [1] : vector<128x128xf32> to vector<128xf32>
    %17 = vector.shape_cast %16 : vector<128xf32> to vector<128x1xf32>
    %18 = arith.truncf %15 : vector<128x128xf32> to vector<128x128xbf16>
    %19 = vector.extract_strided_slice %5 {offsets = [0, 0], sizes = [128, 64], strides = [1, 1]} : vector<128x128xbf16> to vector<128x64xbf16>
    %cst_11 = arith.constant dense<0.000000e+00> : vector<128x64xf32>
    %20 = tpu.matmul %18, %19, %cst_11 {dimension_numbers = #tpu.dot_dimension_numbers<[1], [0], [0], [1], [0, 0, 1, 1], [], []>} : vector<128x128xbf16>, vector<128x64xbf16>, vector<128x64xf32> -> vector<128x64xf32>
    %21 = vector.broadcast %17 : vector<128x1xf32> to vector<128x64xf32>
    %22 = arith.divf %20, %21 : vector<128x64xf32>
    %23 = vector.extract_strided_slice %1 {offsets = [0, 64], sizes = [128, 64], strides = [1, 1]} : vector<128x128xbf16> to vector<128x64xbf16>
    %24 = vector.extract_strided_slice %3 {offsets = [0, 64], sizes = [128, 64], strides = [1, 1]} : vector<128x128xbf16> to vector<128x64xbf16>
    %cst_12 = arith.constant dense<0.000000e+00> : vector<128x128xf32>
    %25 = tpu.matmul %23, %24, %cst_12 {dimension_numbers = #tpu.dot_dimension_numbers<[1], [1], [0], [0], [0, 0, 1, 0], [], []>} : vector<128x64xbf16>, vector<128x64xbf16>, vector<128x128xf32> -> vector<128x128xf32>
    %cst_13 = arith.constant 1.250000e-01 : f32
    %26 = vector.broadcast %cst_13 : f32 to vector<128x128xf32>
    %27 = arith.mulf %25, %26 : vector<128x128xf32>
    %cst_14 = arith.constant dense<0xFF800000> : vector<128xf32>
    %28 = vector.multi_reduction <maximumf>, %27, %cst_14 [1] : vector<128x128xf32> to vector<128xf32>
    %29 = vector.shape_cast %28 : vector<128xf32> to vector<128x1xf32>
    %30 = vector.broadcast %29 : vector<128x1xf32> to vector<128x128xf32>
    %31 = arith.subf %27, %30 : vector<128x128xf32>
    %32 = math.exp %31 : vector<128x128xf32>
    %cst_15 = arith.constant dense<0.000000e+00> : vector<128xf32>
    %33 = vector.multi_reduction <add>, %32, %cst_15 [1] : vector<128x128xf32> to vector<128xf32>
    %34 = vector.shape_cast %33 : vector<128xf32> to vector<128x1xf32>
    %35 = arith.truncf %32 : vector<128x128xf32> to vector<128x128xbf16>
    %36 = vector.extract_strided_slice %5 {offsets = [0, 64], sizes = [128, 64], strides = [1, 1]} : vector<128x128xbf16> to vector<128x64xbf16>
    %cst_16 = arith.constant dense<0.000000e+00> : vector<128x64xf32>
    %37 = tpu.matmul %35, %36, %cst_16 {dimension_numbers = #tpu.dot_dimension_numbers<[1], [0], [0], [1], [0, 0, 1, 1], [], []>} : vector<128x128xbf16>, vector<128x64xbf16>, vector<128x64xf32> -> vector<128x64xf32>
    %38 = vector.broadcast %34 : vector<128x1xf32> to vector<128x64xf32>
    %39 = arith.divf %37, %38 : vector<128x64xf32>
    %40 = tpu.concatenate %22, %39 in 1 : vector<128x64xf32>, vector<128x64xf32> -> vector<128x128xf32>
    %41 = arith.truncf %40 : vector<128x128xf32> to vector<128x128xbf16>
    %c0_17 = arith.constant 0 : index
    %c0_18 = arith.constant 0 : index
    %c0_19 = arith.constant 0 : index
    %42 = vector.load %arg6[%c0_17, %c0_18, %c0_19] : memref<1x128x128xbf16, #tpu.memory_space<vmem>>, vector<1x128x128xbf16>
    %43 = vector.shape_cast %42 : vector<1x128x128xbf16> to vector<128x128xbf16>
    %44 = vector.shape_cast %41 : vector<128x128xbf16> to vector<1x128x128xbf16>
    tpu.vector_store %arg6[%c0_17, %c0_18, %c0_19], %44 {strides = array<i32>} : memref<1x128x128xbf16, #tpu.memory_space<vmem>>, vector<1x128x128xbf16>,
    return
  }
  func.func @transform_0(%arg0: i32, %arg1: i32, %arg2: i32) -> (i32, i32, i32) {
    %c0_i32 = arith.constant 0 : i32
    return %arg0, %arg2, %arg1 : i32, i32, i32
  }
  func.func @transform_1(%arg0: i32, %arg1: i32, %arg2: i32) -> (i32, i32, i32) {
    %c2_i32 = arith.constant 2 : i32
    %0 = arith.addi %c2_i32, %arg1 : i32
    %c0_i32 = arith.constant 0 : i32
    %c0_i32_0 = arith.constant 0 : i32
    return %arg0, %c0_i32, %0 : i32, i32, i32
  }
  func.func @transform_2(%arg0: i32, %arg1: i32, %arg2: i32) -> (i32, i32, i32) {
    %c4_i32 = arith.constant 4 : i32
    %0 = arith.addi %c4_i32, %arg1 : i32
    %c0_i32 = arith.constant 0 : i32
    %c0_i32_0 = arith.constant 0 : i32
    return %arg0, %c0_i32, %0 : i32, i32, i32
  }
  func.func @transform_3(%arg0: i32, %arg1: i32, %arg2: i32) -> (i32, i32, i32) {
    %c0_i32 = arith.constant 0 : i32
    return %arg0, %arg2, %arg1 : i32, i32, i32
  }
}

</mosaic_0001>

<llo_original>
// kernel: tpu_custom_call.1
$region0: #{tpu_custom_call.1}
  #allocation0 [shape = 'u32[]', space=smem, size = 0x4, offset = 0x4, fixed_abs, tag = 'smem constant byte address 0x4 - core index']
  #allocation1 [shape = 'u32[144,128]{1,0:T(1,128)}', space=vmem, size = 0x12000, scoped, tag = 'internal scratch']
  %s0 = inlined_call_operand.hbm [shape: bf16[1,128,768], index: 0, kind: input, shape index: {}]
  %s1 = inlined_call_operand.hbm [shape: bf16[1,128,768], index: 1, kind: input, shape index: {}]
  %s2 = inlined_call_operand.hbm [shape: bf16[1,128,768], index: 2, kind: input, shape index: {}]
  %s3 = inlined_call_operand.hbm [shape: bf16[1,128,256], index: 3, kind: output, shape index: {}]
  %s4 = sld [smem:[#allocation0]]
  $region57: #{tpu_custom_call.1} parent=0
    _
  %s6 = ssub.s32 1, %s4
  %s7 = scalar_select 0, %s6, %s4
  $region1: #{tpu_custom_call.1} parent=0
    #allocation2 [shape = 'u8[65536]{0}', space=vmem, size = 0x10000, scoped, tag = 'input window, operand 0']
    #allocation3 [shape = 's32[2]{0}', space=sflag, size = 0x8, scoped, tag = 'scoped memory for tpu_custom_call.1']
    #allocation4 [shape = 's32[2]{0}', space=sflag, size = 0x8, scoped, tag = 'scoped memory for tpu_custom_call.1']
    #allocation5 [shape = 'u8[65536]{0}', space=vmem, size = 0x10000, scoped, tag = 'input window, operand 1']
    #allocation6 [shape = 's32[2]{0}', space=sflag, size = 0x8, scoped, tag = 'scoped memory for tpu_custom_call.1']
    #allocation7 [shape = 'u8[65536]{0}', space=vmem, size = 0x10000, scoped, tag = 'input window, operand 2']
    #allocation8 [shape = 'u8[65536]{0}', space=vmem, size = 0x10000, scoped, tag = 'output window, operand 0']
    %8 = vsyncpa [#allocation3], 0
    %s9 = scalar_lea.sflag [#allocation3], 1
    %10 = vsyncpa %s9, 0
    %11 = vsyncpa [#allocation6], 0
    %s12 = scalar_lea.sflag [#allocation6], 1
    %13 = vsyncpa %s12, 0
    %14 = vsyncpa [#allocation4], 0
    %s15 = scalar_lea.sflag [#allocation4], 1
    %16 = vsyncpa %s15, 0
    loop: start=0, step=1, limit=4
    $region2: #{tpu_custom_call.1} parent=1 // loop_pre_header
      _
    $region3: #{tpu_custom_call.1} parent=1 // loop_header
      %s18 = sphi 0, %s22
      %p19 = scmp.ge.s32.totalorder %s18, 4
      %s25 = sphi 0, %s44
      %s26 = sphi 0, %s40
      %s27 = sphi 0, %s36
      %s28 = sphi 0, %s25
      %s29 = sphi 0, %s26
      %s30 = sphi 0, %s27
      %s31 = sphi 0, %s28
      %s32 = sphi 0, %s29
      %s33 = sphi 0, %s30
      %s51 = sphi 0, %s53
      %s54 = sphi 0, %s51
      %s55 = sphi 0, %s54
      %s71 = sphi 0, %s55
      %s81 = sphi 0, %s83
      %s84 = sphi 0, %s81
      %s85 = sphi 0, %s84
      %s101 = sphi 0, %s85
      %s111 = sphi 0, %s113
      %s114 = sphi 0, %s111
      %s115 = sphi 0, %s114
      %s131 = sphi 0, %s115
      %s141 = sphi 0, %s143
      %s144 = sphi 0, %s141
      %s145 = sphi 0, %s144
      %s161 = sphi 0, %s145
    $region4: #{tpu_custom_call.1} parent=1 // loop_header_branch
      %21 = sbr.rel (%p19) target = $region8
    $region5: #{tpu_custom_call.1} parent=1 // loop_body
      %s23 = ssub.s32 %s18, 1
      %s24 = ssub.s32 %s18, 2
      %s34 = sadd.s32 1, %s27
      %p35 = scmp.ge.s32.totalorder %s34, 1
      %s36 = scalar_select %p35, 0, %s34
      %s37 = sadd.s32 1, %s26
      %s38 = scalar_select %p35, %s37, %s26
      %p39 = scmp.ge.s32.totalorder %s38, 2
      %s40 = scalar_select %p39, 0, %s38
      %s41 = sadd.s32 1, %s25
      %s42 = scalar_select %p39, %s41, %s25
      %p43 = scmp.ge.s32.totalorder %s42, 1
      %s44 = scalar_select %p43, 0, %s42
      %s45 = ssub.s32 %s25, %s44
      %s46 = ssub.s32 %s27, %s36
      %s47 = sor.u32 %s45, %s46
      %s48 = ssub.s32 %s26, %s40
      %s49 = sor.u32 %s47, %s48
      %p50 = scmp.eq.s32.totalorder %s49, 0
      %s52 = sadd.s32 %s51, 1
      %s53 = scalar_select %p50, %s51, %s52
      %p56 = pneg %p50
      %p57 = scmp.eq.s32.totalorder %s18, 1
      %p58 = por %p56, %p57
      %p59 = scmp.ne.s32.totalorder %s51, %s54
      %p60 = scmp.eq.s32.totalorder %s18, 0
      %p61 = por %p59, %p60
      %p62 = scmp.ne.s32.totalorder %s51, %s54
      %p63 = scmp.eq.s32.totalorder %s23, 1
      %p64 = por %p62, %p63
      %p65 = scmp.ne.s32.totalorder %s54, %s55
      %p66 = scmp.eq.s32.totalorder %s23, 0
      %p67 = por %p65, %p66
      %p68 = scmp.ne.s32.totalorder %s54, %s55
      %p69 = scmp.eq.s32.totalorder %s24, 1
      %p70 = por %p68, %p69
      %p72 = scmp.ne.s32.totalorder %s55, %s71
      %p73 = scmp.eq.s32.totalorder %s24, 0
      %p74 = por %p72, %p73
      %s75 = sadd.s32 %s26, 2
      %s76 = sadd.s32 %s40, 2
      %s77 = ssub.s32 %s25, %s44
      %s78 = ssub.s32 %s75, %s76
      %s79 = sor.u32 %s77, %s78
      %p80 = scmp.eq.s32.totalorder %s79, 0
      %s82 = sadd.s32 %s81, 1
      %s83 = scalar_select %p80, %s81, %s82
      %p86 = pneg %p80
      %p87 = scmp.eq.s32.totalorder %s18, 1
      %p88 = por %p86, %p87
      %p89 = scmp.ne.s32.totalorder %s81, %s84
      %p90 = scmp.eq.s32.totalorder %s18, 0
      %p91 = por %p89, %p90
      %p92 = scmp.ne.s32.totalorder %s81, %s84
      %p93 = scmp.eq.s32.totalorder %s23, 1
      %p94 = por %p92, %p93
      %p95 = scmp.ne.s32.totalorder %s84, %s85
      %p96 = scmp.eq.s32.totalorder %s23, 0
      %p97 = por %p95, %p96
      %p98 = scmp.ne.s32.totalorder %s84, %s85
      %p99 = scmp.eq.s32.totalorder %s24, 1
      %p100 = por %p98, %p99
      %p102 = scmp.ne.s32.totalorder %s85, %s101
      %p103 = scmp.eq.s32.totalorder %s24, 0
      %p104 = por %p102, %p103
      %s105 = sadd.s32 %s26, 4
      %s106 = sadd.s32 %s40, 4
      %s107 = ssub.s32 %s25, %s44
      %s108 = ssub.s32 %s105, %s106
      %s109 = sor.u32 %s107, %s108
      %p110 = scmp.eq.s32.totalorder %s109, 0
      %s112 = sadd.s32 %s111, 1
      %s113 = scalar_select %p110, %s111, %s112
      %p116 = pneg %p110
      %p117 = scmp.eq.s32.totalorder %s18, 1
      %p118 = por %p116, %p117
      %p119 = scmp.ne.s32.totalorder %s111, %s114
      %p120 = scmp.eq.s32.totalorder %s18, 0
      %p121 = por %p119, %p120
      %p122 = scmp.ne.s32.totalorder %s111, %s114
      %p123 = scmp.eq.s32.totalorder %s23, 1
      %p124 = por %p122, %p123
      %p125 = scmp.ne.s32.totalorder %s114, %s115
      %p126 = scmp.eq.s32.totalorder %s23, 0
      %p127 = por %p125, %p126
      %p128 = scmp.ne.s32.totalorder %s114, %s115
      %p129 = scmp.eq.s32.totalorder %s24, 1
      %p130 = por %p128, %p129
      %p132 = scmp.ne.s32.totalorder %s115, %s131
      %p133 = scmp.eq.s32.totalorder %s24, 0
      %p134 = por %p132, %p133
      %s135 = ssub.s32 %s25, %s44
      %s136 = ssub.s32 %s27, %s36
      %s137 = sor.u32 %s135, %s136
      %s138 = ssub.s32 %s26, %s40
      %s139 = sor.u32 %s137, %s138
      %p140 = scmp.eq.s32.totalorder %s139, 0
      %s142 = sadd.s32 %s141, 1
      %s143 = scalar_select %p140, %s141, %s142
      %p146 = pneg %p140
      %p147 = scmp.eq.s32.totalorder %s18, 1
      %p148 = por %p146, %p147
      %p149 = scmp.ne.s32.totalorder %s141, %s144
      %p150 = scmp.eq.s32.totalorder %s18, 0
      %p151 = por %p149, %p150
      %p152 = scmp.ne.s32.totalorder %s141, %s144
      %p153 = scmp.eq.s32.totalorder %s23, 1
      %p154 = por %p152, %p153
      %p155 = scmp.ne.s32.totalorder %s144, %s145
      %p156 = scmp.eq.s32.totalorder %s23, 0
      %p157 = por %p155, %p156
      %p158 = scmp.ne.s32.totalorder %s144, %s145
      %p159 = scmp.eq.s32.totalorder %s24, 1
      %p160 = por %p158, %p159
      %p162 = scmp.ne.s32.totalorder %s145, %s161
      %p163 = scmp.eq.s32.totalorder %s24, 0
      %p164 = por %p162, %p163
      %p165 = scmp.le.s32.totalorder 1, %s18
      %p166 = scmp.lt.s32.totalorder %s18, 3
      %p167 = pnand %p165, %p166
      %p168 = pneg %p167
      // Predicated region
      $region9: #{tpu_custom_call.1} parent=5 // pred_check
        _
      $region10: #{tpu_custom_call.1} parent=5 // pred_check_branch
        %170 = sbr.rel (%p167) target = $region12
      $region11: #{tpu_custom_call.1} parent=5 // pred_region
        %s171 = ssub.s32 %s18, 1
      $region12: #{tpu_custom_call.1} parent=5 // pred_fallthru
        _
      %p172 = scmp.lt.s32.totalorder %s18, 2
      // Predicated region
      $region13: #{tpu_custom_call.1} parent=5 // pred_check
        %p173 = pneg %p172
      $region14: #{tpu_custom_call.1} parent=5 // pred_check_branch
        %175 = sbr.rel (%p173) target = $region16
      $region15: #{tpu_custom_call.1} parent=5 // pred_region
        // Predicated region
        $region17: #{tpu_custom_call.1} parent=15 // pred_check
          %p176 = pneg %p61
        $region18: #{tpu_custom_call.1} parent=15 // pred_check_branch
          %178 = sbr.rel (%p176) target = $region20
        $region19: #{tpu_custom_call.1} parent=15 // pred_region
          %s179 = sand.u32 %s51, 1
          %s180 = scalar_lea.sflag [#allocation3], %s179
          %s181 = sand.u32 %s51, 1
          %s182 = smul.addr %s181, 64
          %s183 = scalar_lea.vmem [#allocation2], %s182
          %s184 = smul.u32 16, %s27
          %s186 = ssub.s32 1024, 1024
          %187 = vsyncadd %s180, %s186
          %s188 = smul.addr %s184, 6
          %s189 = sadd.s32 %s26, %s188
          %s190 = smul.addr %s25, 96
          %s191 = sadd.s32 %s189, %s190
          %s192 = smul.addr %s191, 64
          %s193 = scalar_lea.hbm %s0, %s192
          %s194 = sshll.u32 %s183, 4
          %s195 = int_to_ptr.vmem [resolvable:$true] %s194
          %200 = dma.hbm_to_vmem [thread:$0]  %s193, 1024, %s195, %s180, 384, 64, 4
        $region20: #{tpu_custom_call.1} parent=15 // pred_fallthru
          _
        // Predicated region
        $region21: #{tpu_custom_call.1} parent=15 // pred_check
          %p201 = pneg %p91
        $region22: #{tpu_custom_call.1} parent=15 // pred_check_branch
          %203 = sbr.rel (%p201) target = $region24
        $region23: #{tpu_custom_call.1} parent=15 // pred_region
          %s204 = sand.u32 %s18, 1
          %s205 = scalar_lea.sflag [#allocation6], %s204
          %s206 = sand.u32 %s81, 1
          %s207 = smul.addr %s206, 64
          %s208 = scalar_lea.vmem [#allocation5], %s207
          %s209 = sadd.s32 %s26, 2
          %s211 = ssub.s32 1024, 1024
          %212 = vsyncadd %s205, %s211
          %s213 = smul.addr %s25, 96
          %s214 = sadd.s32 %s209, %s213
          %s215 = smul.addr %s214, 64
          %s216 = scalar_lea.hbm %s1, %s215
          %s217 = sshll.u32 %s208, 4
          %s218 = int_to_ptr.vmem [resolvable:$true] %s217
          %223 = dma.hbm_to_vmem [thread:$0]  %s216, 1024, %s218, %s205, 384, 64, 4
        $region24: #{tpu_custom_call.1} parent=15 // pred_fallthru
          _
        // Predicated region
        $region25: #{tpu_custom_call.1} parent=15 // pred_check
          %p224 = pneg %p121
        $region26: #{tpu_custom_call.1} parent=15 // pred_check_branch
          %226 = sbr.rel (%p224) target = $region28
        $region27: #{tpu_custom_call.1} parent=15 // pred_region
          %s227 = sand.u32 %s18, 1
          %s228 = scalar_lea.sflag [#allocation6], %s227
          %s229 = sand.u32 %s111, 1
          %s230 = smul.addr %s229, 64
          %s231 = scalar_lea.vmem [#allocation7], %s230
          %s232 = sadd.s32 %s26, 4
          %s234 = ssub.s32 1024, 1024
          %235 = vsyncadd %s228, %s234
          %s236 = smul.addr %s25, 96
          %s237 = sadd.s32 %s232, %s236
          %s238 = smul.addr %s237, 64
          %s239 = scalar_lea.hbm %s2, %s238
          %s240 = sshll.u32 %s231, 4
          %s241 = int_to_ptr.vmem [resolvable:$true] %s240
          %246 = dma.hbm_to_vmem [thread:$0]  %s239, 1024, %s241, %s228, 384, 64, 4
        $region28: #{tpu_custom_call.1} parent=15 // pred_fallthru
          _
      $region16: #{tpu_custom_call.1} parent=5 // pred_fallthru
        _
      %p247 = scmp.le.s32.totalorder 1, %s18
      %p248 = scmp.lt.s32.totalorder %s18, 3
      %p249 = pnand %p247, %p248
      %p250 = pneg %p249
      // Predicated region
      $region29: #{tpu_custom_call.1} parent=5 // pred_check
        _
      $region30: #{tpu_custom_call.1} parent=5 // pred_check_branch
        %252 = sbr.rel (%p249) target = $region32
      $region31: #{tpu_custom_call.1} parent=5 // pred_region
        %s253 = ssub.s32 %s18, 1
        %s254 = sand.u32 %s54, 1
        %s255 = scalar_lea.sflag [#allocation3], %s254
        %s256 = sand.u32 %s54, 1
        %s257 = smul.addr %s256, 64
        %s258 = scalar_lea.vmem [#allocation2], %s257
        // Predicated region
        $region33: #{tpu_custom_call.1} parent=31 // pred_check
          %p259 = pneg %p67
        $region34: #{tpu_custom_call.1} parent=31 // pred_check_branch
          %261 = sbr.rel (%p259) target = $region36
        $region35: #{tpu_custom_call.1} parent=31 // pred_region
          %262 = dma.done %s255, 1024
        $region36: #{tpu_custom_call.1} parent=31 // pred_fallthru
          _
        %s263 = sand.u32 %s23, 1
        %s264 = scalar_lea.sflag [#allocation6], %s263
        %s265 = sand.u32 %s84, 1
        %s266 = smul.addr %s265, 64
        %s267 = scalar_lea.vmem [#allocation5], %s266
        // Predicated region
        $region37: #{tpu_custom_call.1} parent=31 // pred_check
          %p268 = pneg %p97
        $region38: #{tpu_custom_call.1} parent=31 // pred_check_branch
          %270 = sbr.rel (%p268) target = $region40
        $region39: #{tpu_custom_call.1} parent=31 // pred_region
          %271 = dma.done %s264, 1024
        $region40: #{tpu_custom_call.1} parent=31 // pred_fallthru
          _
        %s272 = sand.u32 %s23, 1
        %s273 = scalar_lea.sflag [#allocation6], %s272
        %s274 = sand.u32 %s114, 1
        %s275 = smul.addr %s274, 64
        %s276 = scalar_lea.vmem [#allocation7], %s275
        // Predicated region
        $region41: #{tpu_custom_call.1} parent=31 // pred_check
          %p277 = pneg %p127
        $region42: #{tpu_custom_call.1} parent=31 // pred_check_branch
          %279 = sbr.rel (%p277) target = $region44
        $region43: #{tpu_custom_call.1} parent=31 // pred_region
          %280 = dma.done %s273, 1024
        $region44: #{tpu_custom_call.1} parent=31 // pred_fallthru
          _
        %s281 = sand.u32 %s54, 1
        %s282 = scalar_lea.sflag [#allocation3], %s281
        %s283 = sand.u32 %s54, 1
        %s284 = smul.addr %s283, 64
        %s285 = scalar_lea.vmem [#allocation2], %s284
        %p286 = pneg %p67
        %p287 = pneg %p64
        %s288 = sand.u32 %s23, 1
        %s289 = scalar_lea.sflag [#allocation6], %s288
        %s290 = sand.u32 %s84, 1
        %s291 = smul.addr %s290, 64
        %s292 = scalar_lea.vmem [#allocation5], %s291
        %p293 = pneg %p97
        %p294 = pneg %p94
        %s295 = sand.u32 %s23, 1
        %s296 = scalar_lea.sflag [#allocation6], %s295
        %s297 = sand.u32 %s114, 1
        %s298 = smul.addr %s297, 64
        %s299 = scalar_lea.vmem [#allocation7], %s298
        %p300 = pneg %p127
        %p301 = pneg %p124
        %p302 = pneg %p157
        %p303 = pneg %p154
        %s304 = sand.u32 %s144, 1
        %s305 = scalar_lea.sflag [#allocation4], %s304
        %s306 = sand.u32 %s144, 1
        %s307 = smul.addr %s306, 64
        %s308 = scalar_lea.vmem [#allocation8], %s307
        %s309 = smul.u32 16, %s30
        %s310 = sadd.s32 %s29, 2
        %s311 = sadd.s32 %s29, 4
        %s312 = smul.u32 16, %s30
        %v314 = vld [vmem:[%s258] sm:$0xf]
        %v315 = vld [vmem:[%s258 + $0x4] sm:$0xf]
        %v316 = vld [vmem:[%s258 + $0x8] sm:$0xf]
        %v317 = vld [vmem:[%s258 + $0xc] sm:$0xf]
        %v318 = vld [vmem:[%s258 + $0x10] sm:$0xf]
        %v319 = vld [vmem:[%s258 + $0x14] sm:$0xf]
        %v320 = vld [vmem:[%s258 + $0x18] sm:$0xf]
        %v321 = vld [vmem:[%s258 + $0x1c] sm:$0xf]
        %v322 = vld [vmem:[%s258 + $0x20] sm:$0xf]
        %v323 = vld [vmem:[%s258 + $0x24] sm:$0xf]
        %v324 = vld [vmem:[%s258 + $0x28] sm:$0xf]
        %v325 = vld [vmem:[%s258 + $0x2c] sm:$0xf]
        %v326 = vld [vmem:[%s258 + $0x30] sm:$0xf]
        %v327 = vld [vmem:[%s258 + $0x34] sm:$0xf]
        %v328 = vld [vmem:[%s258 + $0x38] sm:$0xf]
        %v329 = vld [vmem:[%s258 + $0x3c] sm:$0xf]
        %v330 = vld [vmem:[%s267] sm:$0xf]
        %v331 = vld [vmem:[%s267 + $0x4] sm:$0xf]
        %v332 = vld [vmem:[%s267 + $0x8] sm:$0xf]
        %v333 = vld [vmem:[%s267 + $0xc] sm:$0xf]
        %v334 = vld [vmem:[%s267 + $0x10] sm:$0xf]
        %v335 = vld [vmem:[%s267 + $0x14] sm:$0xf]
        %v336 = vld [vmem:[%s267 + $0x18] sm:$0xf]
        %v337 = vld [vmem:[%s267 + $0x1c] sm:$0xf]
        %v338 = vld [vmem:[%s267 + $0x20] sm:$0xf]
        %v339 = vld [vmem:[%s267 + $0x24] sm:$0xf]
        %v340 = vld [vmem:[%s267 + $0x28] sm:$0xf]
        %v341 = vld [vmem:[%s267 + $0x2c] sm:$0xf]
        %v342 = vld [vmem:[%s267 + $0x30] sm:$0xf]
        %v343 = vld [vmem:[%s267 + $0x34] sm:$0xf]
        %v344 = vld [vmem:[%s267 + $0x38] sm:$0xf]
        %v345 = vld [vmem:[%s267 + $0x3c] sm:$0xf]
        %v346 = vld [vmem:[%s276] sm:$0xf]
        %v347 = vld [vmem:[%s276 + $0x4] sm:$0xf]
        %v348 = vld [vmem:[%s276 + $0x8] sm:$0xf]
        %v349 = vld [vmem:[%s276 + $0xc] sm:$0xf]
        %v350 = vld [vmem:[%s276 + $0x10] sm:$0xf]
        %v351 = vld [vmem:[%s276 + $0x14] sm:$0xf]
        %v352 = vld [vmem:[%s276 + $0x18] sm:$0xf]
        %v353 = vld [vmem:[%s276 + $0x1c] sm:$0xf]
        %v354 = vld [vmem:[%s276 + $0x20] sm:$0xf]
        %v355 = vld [vmem:[%s276 + $0x24] sm:$0xf]
        %v356 = vld [vmem:[%s276 + $0x28] sm:$0xf]
        %v357 = vld [vmem:[%s276 + $0x2c] sm:$0xf]
        %v358 = vld [vmem:[%s276 + $0x30] sm:$0xf]
        %v359 = vld [vmem:[%s276 + $0x34] sm:$0xf]
        %v360 = vld [vmem:[%s276 + $0x38] sm:$0xf]
        %v361 = vld [vmem:[%s276 + $0x3c] sm:$0xf]
        %v378 = vunpack.c.l.b16 %v314
        %v379 = vunpack.c.l.b16 %v315
        %v380 = vunpack.c.l.b16 %v316
        %v381 = vunpack.c.l.b16 %v317
        %v382 = vunpack.c.l.b16 %v318
        %v383 = vunpack.c.l.b16 %v319
        %v384 = vunpack.c.l.b16 %v320
        %v385 = vunpack.c.l.b16 %v321
        %v386 = vunpack.c.l.b16 %v322
        %v387 = vunpack.c.l.b16 %v323
        %v388 = vunpack.c.l.b16 %v324
        %v389 = vunpack.c.l.b16 %v325
        %v390 = vunpack.c.l.b16 %v326
        %v391 = vunpack.c.l.b16 %v327
        %v392 = vunpack.c.l.b16 %v328
        %v393 = vunpack.c.l.b16 %v329
        %v394 = vpack.c.b16 %v379, %v378
        %v395 = vpack.c.b16 %v381, %v380
        %v396 = vpack.c.b16 %v383, %v382
        %v397 = vpack.c.b16 %v385, %v384
        %v398 = vpack.c.b16 %v387, %v386
        %v399 = vpack.c.b16 %v389, %v388
        %v400 = vpack.c.b16 %v391, %v390
        %v401 = vpack.c.b16 %v393, %v392
        %v418 = vunpack.c.l.b16 %v330
        %v419 = vunpack.c.l.b16 %v331
        %v420 = vunpack.c.l.b16 %v332
        %v421 = vunpack.c.l.b16 %v333
        %v422 = vunpack.c.l.b16 %v334
        %v423 = vunpack.c.l.b16 %v335
        %v424 = vunpack.c.l.b16 %v336
        %v425 = vunpack.c.l.b16 %v337
        %v426 = vunpack.c.l.b16 %v338
        %v427 = vunpack.c.l.b16 %v339
        %v428 = vunpack.c.l.b16 %v340
        %v429 = vunpack.c.l.b16 %v341
        %v430 = vunpack.c.l.b16 %v342
        %v431 = vunpack.c.l.b16 %v343
        %v432 = vunpack.c.l.b16 %v344
        %v433 = vunpack.c.l.b16 %v345
        %v434 = vpack.c.b16 %v419, %v418
        %v435 = vpack.c.b16 %v421, %v420
        %v436 = vpack.c.b16 %v423, %v422
        %v437 = vpack.c.b16 %v425, %v424
        %v438 = vpack.c.b16 %v427, %v426
        %v439 = vpack.c.b16 %v429, %v428
        %v440 = vpack.c.b16 %v431, %v430
        %v441 = vpack.c.b16 %v433, %v432
        %vm442 = vcmask 523264
        %v444 = vsel %vm442, %v394, 0
        %v447 = vsel %vm442, %v395, 0
        %v450 = vsel %vm442, %v396, 0
        %v453 = vsel %vm442, %v397, 0
        %v456 = vsel %vm442, %v398, 0
        %v459 = vsel %vm442, %v399, 0
        %v462 = vsel %vm442, %v400, 0
        %v465 = vsel %vm442, %v401, 0
        %v468 = vsel %vm442, %v434, 0
        %v471 = vsel %vm442, %v435, 0
        %v474 = vsel %vm442, %v436, 0
        %v477 = vsel %vm442, %v437, 0
        %v480 = vsel %vm442, %v438, 0
        %v483 = vsel %vm442, %v439, 0
        %v486 = vsel %vm442, %v440, 0
        %v489 = vsel %vm442, %v441, 0
        %491 = vmatprep.subr.bf16.mxu0 0
        %492 = vmatpush1.bf16.xpose.msra.mxu0 %v468
        %493 = vmatprep.subr.bf16.mxu0 0
        %494 = vmatpush1.bf16.xpose.msra.mxu0 %v471
        %495 = vmatprep.subr.bf16.mxu0 0
        %496 = vmatpush1.bf16.xpose.msra.mxu0 %v474
        %497 = vmatprep.subr.bf16.mxu0 0
        %498 = vmatpush1.bf16.xpose.msra.mxu0 %v477
        %499 = vmatprep.subr.bf16.mxu0 0
        %500 = vmatpush1.bf16.xpose.msra.mxu0 %v480
        %501 = vmatprep.subr.bf16.mxu0 0
        %502 = vmatpush1.bf16.xpose.msra.mxu0 %v483
        %503 = vmatprep.subr.bf16.mxu0 0
        %504 = vmatpush1.bf16.xpose.msra.mxu0 %v486
        %505 = vmatprep.subr.bf16.mxu0 0
        %506 = vmatpush1.bf16.xpose.msra.mxu0 %v489
        %507 = vmatprep.subr.bf16.mxu0 0
        %508 = vmatpush1.bf16.xpose.msra.mxu0 0
        %509 = vmatprep.subr.bf16.mxu0 0
        %510 = vmatpush1.bf16.xpose.msra.mxu0 0
        %511 = vmatprep.subr.bf16.mxu0 0
        %512 = vmatpush1.bf16.xpose.msra.mxu0 0
        %513 = vmatprep.subr.bf16.mxu0 0
        %514 = vmatpush1.bf16.xpose.msra.mxu0 0
        %515 = vmatprep.subr.bf16.mxu0 0
        %516 = vmatpush1.bf16.xpose.msra.mxu0 0
        %517 = vmatprep.subr.bf16.mxu0 0
        %518 = vmatpush1.bf16.xpose.msra.mxu0 0
        %519 = vmatprep.subr.bf16.mxu0 0
        %520 = vmatpush1.bf16.xpose.msra.mxu0 0
        %521 = vmatprep.subr.bf16.mxu0 0
        %522 = vmatpush1.bf16.xpose.msra.mxu0 0
        %523 = vmatprep.mubr.bf16.mxu0 0
        %524 = vmatmul.mubr.bf16.gmra.mrb[0].mxu0 %v444
        %v525 = vpop.f32.mrb[0].mxu0
        %v526 = vadd.f32 0.0, %v525
        %v527 = vpop.f32.mrb[0].mxu0
        %v528 = vpop.f32.mrb[0].mxu0
        %v529 = vadd.f32 0.0, %v528
        %v530 = vpop.f32.mrb[0].mxu0
        %531 = vmatprep.mubr.bf16.mxu0 0
        %532 = vmatmul.mubr.bf16.gmra.mrb[0].mxu0 %v447
        %v533 = vpop.f32.mrb[0].mxu0
        %v534 = vadd.f32 0.0, %v533
        %v535 = vpop.f32.mrb[0].mxu0
        %v536 = vpop.f32.mrb[0].mxu0
        %v537 = vadd.f32 0.0, %v536
        %v538 = vpop.f32.mrb[0].mxu0
        %539 = vmatprep.mubr.bf16.mxu0 0
        %540 = vmatmul.mubr.bf16.gmra.mrb[0].mxu0 %v450
        %v541 = vpop.f32.mrb[0].mxu0
        %v542 = vadd.f32 0.0, %v541
        %v543 = vpop.f32.mrb[0].mxu0
        %v544 = vpop.f32.mrb[0].mxu0
        %v545 = vadd.f32 0.0, %v544
        %v546 = vpop.f32.mrb[0].mxu0
        %547 = vmatprep.mubr.bf16.mxu0 0
        %548 = vmatmul.mubr.bf16.gmra.mrb[0].mxu0 %v453
        %v549 = vpop.f32.mrb[0].mxu0
        %v550 = vadd.f32 0.0, %v549
        %v551 = vpop.f32.mrb[0].mxu0
        %v552 = vpop.f32.mrb[0].mxu0
        %v553 = vadd.f32 0.0, %v552
        %v554 = vpop.f32.mrb[0].mxu0
        %555 = vmatprep.mubr.bf16.mxu0 0
        %556 = vmatmul.mubr.bf16.gmra.mrb[0].mxu0 %v456
        %v557 = vpop.f32.mrb[0].mxu0
        %v558 = vadd.f32 0.0, %v557
        %v559 = vpop.f32.mrb[0].mxu0
        %v560 = vpop.f32.mrb[0].mxu0
        %v561 = vadd.f32 0.0, %v560
        %v562 = vpop.f32.mrb[0].mxu0
        %563 = vmatprep.mubr.bf16.mxu0 0
        %564 = vmatmul.mubr.bf16.gmra.mrb[0].mxu0 %v459
        %v565 = vpop.f32.mrb[0].mxu0
        %v566 = vadd.f32 0.0, %v565
        %v567 = vpop.f32.mrb[0].mxu0
        %v568 = vpop.f32.mrb[0].mxu0
        %v569 = vadd.f32 0.0, %v568
        %v570 = vpop.f32.mrb[0].mxu0
        %571 = vmatprep.mubr.bf16.mxu0 0
        %572 = vmatmul.mubr.bf16.gmra.mrb[0].mxu0 %v462
        %v573 = vpop.f32.mrb[0].mxu0
        %v574 = vadd.f32 0.0, %v573
        %v575 = vpop.f32.mrb[0].mxu0
        %v576 = vpop.f32.mrb[0].mxu0
        %v577 = vadd.f32 0.0, %v576
        %v578 = vpop.f32.mrb[0].mxu0
        %579 = vmatprep.mubr.bf16.mxu0 0
        %580 = vmatmul.mubr.bf16.gmra.mrb[0].mxu0 %v465
        %v581 = vpop.f32.mrb[0].mxu0
        %v582 = vadd.f32 0.0, %v581
        %v583 = vpop.f32.mrb[0].mxu0
        %v584 = vpop.f32.mrb[0].mxu0
        %v585 = vadd.f32 0.0, %v584
        %v586 = vpop.f32.mrb[0].mxu0
        %587 = vdwg.mxu0
        %v588 = vmul.f32 %v526, 0.125
        %v589 = vmul.f32 %v529, 0.125
        %v590 = vmul.f32 %v534, 0.125
        %v591 = vmul.f32 %v537, 0.125
        %v592 = vmul.f32 %v542, 0.125
        %v593 = vmul.f32 %v545, 0.125
        %v594 = vmul.f32 %v550, 0.125
        %v595 = vmul.f32 %v553, 0.125
        %v596 = vmul.f32 %v558, 0.125
        %v597 = vmul.f32 %v561, 0.125
        %v598 = vmul.f32 %v566, 0.125
        %v599 = vmul.f32 %v569, 0.125
        %v600 = vmul.f32 %v574, 0.125
        %v601 = vmul.f32 %v577, 0.125
        %v602 = vmul.f32 %v582, 0.125
        %v603 = vmul.f32 %v585, 0.125
        %604 = vmax.xlane.f32.xlu0 %v588
        %v605 = vpop.xlane.xlu0 %604
        %606 = vmax.xlane.f32.xlu0 %v589
        %v607 = vpop.xlane.xlu0 %606
        %608 = vmax.xlane.f32.xlu0 %v590
        %v609 = vpop.xlane.xlu0 %608
        %610 = vmax.xlane.f32.xlu0 %v591
        %v611 = vpop.xlane.xlu0 %610
        %612 = vmax.xlane.f32.xlu0 %v592
        %v613 = vpop.xlane.xlu0 %612
        %614 = vmax.xlane.f32.xlu0 %v593
        %v615 = vpop.xlane.xlu0 %614
        %616 = vmax.xlane.f32.xlu0 %v594
        %v617 = vpop.xlane.xlu0 %616
        %618 = vmax.xlane.f32.xlu0 %v595
        %v619 = vpop.xlane.xlu0 %618
        %620 = vmax.xlane.f32.xlu0 %v596
        %v621 = vpop.xlane.xlu0 %620
        %622 = vmax.xlane.f32.xlu0 %v597
        %v623 = vpop.xlane.xlu0 %622
        %624 = vmax.xlane.f32.xlu0 %v598
        %v625 = vpop.xlane.xlu0 %624
        %626 = vmax.xlane.f32.xlu0 %v599
        %v627 = vpop.xlane.xlu0 %626
        %628 = vmax.xlane.f32.xlu0 %v600
        %v629 = vpop.xlane.xlu0 %628
        %630 = vmax.xlane.f32.xlu0 %v601
        %v631 = vpop.xlane.xlu0 %630
        %632 = vmax.xlane.f32.xlu0 %v602
        %v633 = vpop.xlane.xlu0 %632
        %634 = vmax.xlane.f32.xlu0 %v603
        %v635 = vpop.xlane.xlu0 %634
        %v636 = vsub.f32 %v588, %v605
        %v637 = vsub.f32 %v589, %v607
        %v638 = vsub.f32 %v590, %v609
        %v639 = vsub.f32 %v591, %v611
        %v640 = vsub.f32 %v592, %v613
        %v641 = vsub.f32 %v593, %v615
        %v642 = vsub.f32 %v594, %v617
        %v643 = vsub.f32 %v595, %v619
        %v644 = vsub.f32 %v596, %v621
        %v645 = vsub.f32 %v597, %v623
        %v646 = vsub.f32 %v598, %v625
        %v647 = vsub.f32 %v599, %v627
        %v648 = vsub.f32 %v600, %v629
        %v649 = vsub.f32 %v601, %v631
        %v650 = vsub.f32 %v602, %v633
        %v651 = vsub.f32 %v603, %v635
        %v652 = vmul.f32 %v636, 1.442695
        %v653 = vpow.pop %v652
        %v654 = vmul.f32 %v637, 1.442695
        %v655 = vpow.pop %v654
        %v656 = vmul.f32 %v638, 1.442695
        %v657 = vpow.pop %v656
        %v658 = vmul.f32 %v639, 1.442695
        %v659 = vpow.pop %v658
        %v660 = vmul.f32 %v640, 1.442695
        %v661 = vpow.pop %v660
        %v662 = vmul.f32 %v641, 1.442695
        %v663 = vpow.pop %v662
        %v664 = vmul.f32 %v642, 1.442695
        %v665 = vpow.pop %v664
        %v666 = vmul.f32 %v643, 1.442695
        %v667 = vpow.pop %v666
        %v668 = vmul.f32 %v644, 1.442695
        %v669 = vpow.pop %v668
        %v670 = vmul.f32 %v645, 1.442695
        %v671 = vpow.pop %v670
        %v672 = vmul.f32 %v646, 1.442695
        %v673 = vpow.pop %v672
        %v674 = vmul.f32 %v647, 1.442695
        %v675 = vpow.pop %v674
        %v676 = vmul.f32 %v648, 1.442695
        %v677 = vpow.pop %v676
        %v678 = vmul.f32 %v649, 1.442695
        %v679 = vpow.pop %v678
        %v680 = vmul.f32 %v650, 1.442695
        %v681 = vpow.pop %v680
        %v682 = vmul.f32 %v651, 1.442695
        %v683 = vpow.pop %v682
        %684 = vadd.xlane.f32.xlu0 %v653
        %v685 = vpop.xlane.xlu0 %684
        %686 = vadd.xlane.f32.xlu0 %v655
        %v687 = vpop.xlane.xlu0 %686
        %688 = vadd.xlane.f32.xlu0 %v657
        %v689 = vpop.xlane.xlu0 %688
        %690 = vadd.xlane.f32.xlu0 %v659
        %v691 = vpop.xlane.xlu0 %690
        %692 = vadd.xlane.f32.xlu0 %v661
        %v693 = vpop.xlane.xlu0 %692
        %694 = vadd.xlane.f32.xlu0 %v663
        %v695 = vpop.xlane.xlu0 %694
        %696 = vadd.xlane.f32.xlu0 %v665
        %v697 = vpop.xlane.xlu0 %696
        %698 = vadd.xlane.f32.xlu0 %v667
        %v699 = vpop.xlane.xlu0 %698
        %700 = vadd.xlane.f32.xlu0 %v669
        %v701 = vpop.xlane.xlu0 %700
        %702 = vadd.xlane.f32.xlu0 %v671
        %v703 = vpop.xlane.xlu0 %702
        %704 = vadd.xlane.f32.xlu0 %v673
        %v705 = vpop.xlane.xlu0 %704
        %706 = vadd.xlane.f32.xlu0 %v675
        %v707 = vpop.xlane.xlu0 %706
        %708 = vadd.xlane.f32.xlu0 %v677
        %v709 = vpop.xlane.xlu0 %708
        %710 = vadd.xlane.f32.xlu0 %v679
        %v711 = vpop.xlane.xlu0 %710
        %712 = vadd.xlane.f32.xlu0 %v681
        %v713 = vpop.xlane.xlu0 %712
        %714 = vadd.xlane.f32.xlu0 %v683
        %v715 = vpop.xlane.xlu0 %714
        %v716 = vpack.c.bf16 %v655, %v653
        %v717 = vpack.c.bf16 %v659, %v657
        %v718 = vpack.c.bf16 %v663, %v661
        %v719 = vpack.c.bf16 %v667, %v665
        %v720 = vpack.c.bf16 %v671, %v669
        %v721 = vpack.c.bf16 %v675, %v673
        %v722 = vpack.c.bf16 %v679, %v677
        %v723 = vpack.c.bf16 %v683, %v681
        %v740 = vunpack.c.l.b16 %v346
        %v741 = vunpack.c.l.b16 %v347
        %v742 = vunpack.c.l.b16 %v348
        %v743 = vunpack.c.l.b16 %v349
        %v744 = vunpack.c.l.b16 %v350
        %v745 = vunpack.c.l.b16 %v351
        %v746 = vunpack.c.l.b16 %v352
        %v747 = vunpack.c.l.b16 %v353
        %v748 = vunpack.c.l.b16 %v354
        %v749 = vunpack.c.l.b16 %v355
        %v750 = vunpack.c.l.b16 %v356
        %v751 = vunpack.c.l.b16 %v357
        %v752 = vunpack.c.l.b16 %v358
        %v753 = vunpack.c.l.b16 %v359
        %v754 = vunpack.c.l.b16 %v360
        %v755 = vunpack.c.l.b16 %v361
        %v756 = vpack.c.b16 %v741, %v740
        %v757 = vpack.c.b16 %v743, %v742
        %v758 = vpack.c.b16 %v745, %v744
        %v759 = vpack.c.b16 %v747, %v746
        %v760 = vpack.c.b16 %v749, %v748
        %v761 = vpack.c.b16 %v751, %v750
        %v762 = vpack.c.b16 %v753, %v752
        %v763 = vpack.c.b16 %v755, %v754
        %772 = vmatprep.subr.bf16.mxu0 0
        %773 = vmatpush1.bf16.msra.mxu0 %v756
        %774 = vmatprep.subr.bf16.mxu0 0
        %775 = vmatpush1.bf16.msra.mxu0 %v757
        %776 = vmatprep.subr.bf16.mxu0 0
        %777 = vmatpush1.bf16.msra.mxu0 %v758
        %778 = vmatprep.subr.bf16.mxu0 0
        %779 = vmatpush1.bf16.msra.mxu0 %v759
        %780 = vmatprep.subr.bf16.mxu0 0
        %781 = vmatpush1.bf16.msra.mxu0 %v760
        %782 = vmatprep.subr.bf16.mxu0 0
        %783 = vmatpush1.bf16.msra.mxu0 %v761
        %784 = vmatprep.subr.bf16.mxu0 0
        %785 = vmatpush1.bf16.msra.mxu0 %v762
        %786 = vmatprep.subr.bf16.mxu0 0
        %787 = vmatpush1.bf16.msra.mxu0 %v763
        %788 = vmatprep.subr.bf16.mxu0 0
        %789 = vmatpush1.bf16.msra.mxu0 0
        %790 = vmatprep.subr.bf16.mxu0 0
        %791 = vmatpush1.bf16.msra.mxu0 0
        %792 = vmatprep.subr.bf16.mxu0 0
        %793 = vmatpush1.bf16.msra.mxu0 0
        %794 = vmatprep.subr.bf16.mxu0 0
        %795 = vmatpush1.bf16.msra.mxu0 0
        %796 = vmatprep.subr.bf16.mxu0 0
        %797 = vmatpush1.bf16.msra.mxu0 0
        %798 = vmatprep.subr.bf16.mxu0 0
        %799 = vmatpush1.bf16.msra.mxu0 0
        %800 = vmatprep.subr.bf16.mxu0 0
        %801 = vmatpush1.bf16.msra.mxu0 0
        %802 = vmatprep.subr.bf16.mxu0 0
        %803 = vmatpush1.bf16.msra.mxu0 0
        %804 = vmatprep.mubr.bf16.mxu0 0
        %805 = vmatmul.mubr.bf16.gmra.mrb[0].mxu0 %v716
        %v806 = vpop.f32.mrb[0].mxu0
        %v807 = vadd.f32 0.0, %v806
        %v808 = vpop.f32.mrb[0].mxu0
        %v809 = vpop.f32.mrb[0].mxu0
        %v810 = vadd.f32 0.0, %v809
        %v811 = vpop.f32.mrb[0].mxu0
        %812 = vmatprep.mubr.bf16.mxu0 0
        %813 = vmatmul.mubr.bf16.gmra.mrb[0].mxu0 %v717
        %v814 = vpop.f32.mrb[0].mxu0
        %v815 = vadd.f32 0.0, %v814
        %v816 = vpop.f32.mrb[0].mxu0
        %v817 = vpop.f32.mrb[0].mxu0
        %v818 = vadd.f32 0.0, %v817
        %v819 = vpop.f32.mrb[0].mxu0
        %820 = vmatprep.mubr.bf16.mxu0 0
        %821 = vmatmul.mubr.bf16.gmra.mrb[0].mxu0 %v718
        %v822 = vpop.f32.mrb[0].mxu0
        %v823 = vadd.f32 0.0, %v822
        %v824 = vpop.f32.mrb[0].mxu0
        %v825 = vpop.f32.mrb[0].mxu0
        %v826 = vadd.f32 0.0, %v825
        %v827 = vpop.f32.mrb[0].mxu0
        %828 = vmatprep.mubr.bf16.mxu0 0
        %829 = vmatmul.mubr.bf16.gmra.mrb[0].mxu0 %v719
        %v830 = vpop.f32.mrb[0].mxu0
        %v831 = vadd.f32 0.0, %v830
        %v832 = vpop.f32.mrb[0].mxu0
        %v833 = vpop.f32.mrb[0].mxu0
        %v834 = vadd.f32 0.0, %v833
        %v835 = vpop.f32.mrb[0].mxu0
        %836 = vmatprep.mubr.bf16.mxu0 0
        %837 = vmatmul.mubr.bf16.gmra.mrb[0].mxu0 %v720
        %v838 = vpop.f32.mrb[0].mxu0
        %v839 = vadd.f32 0.0, %v838
        %v840 = vpop.f32.mrb[0].mxu0
        %v841 = vpop.f32.mrb[0].mxu0
        %v842 = vadd.f32 0.0, %v841
        %v843 = vpop.f32.mrb[0].mxu0
        %844 = vmatprep.mubr.bf16.mxu0 0
        %845 = vmatmul.mubr.bf16.gmra.mrb[0].mxu0 %v721
        %v846 = vpop.f32.mrb[0].mxu0
        %v847 = vadd.f32 0.0, %v846
        %v848 = vpop.f32.mrb[0].mxu0
        %v849 = vpop.f32.mrb[0].mxu0
        %v850 = vadd.f32 0.0, %v849
        %v851 = vpop.f32.mrb[0].mxu0
        %852 = vmatprep.mubr.bf16.mxu0 0
        %853 = vmatmul.mubr.bf16.gmra.mrb[0].mxu0 %v722
        %v854 = vpop.f32.mrb[0].mxu0
        %v855 = vadd.f32 0.0, %v854
        %v856 = vpop.f32.mrb[0].mxu0
        %v857 = vpop.f32.mrb[0].mxu0
        %v858 = vadd.f32 0.0, %v857
        %v859 = vpop.f32.mrb[0].mxu0
        %860 = vmatprep.mubr.bf16.mxu0 0
        %861 = vmatmul.mubr.bf16.gmra.mrb[0].mxu0 %v723
        %v862 = vpop.f32.mrb[0].mxu0
        %v863 = vadd.f32 0.0, %v862
        %v864 = vpop.f32.mrb[0].mxu0
        %v865 = vpop.f32.mrb[0].mxu0
        %v866 = vadd.f32 0.0, %v865
        %v867 = vpop.f32.mrb[0].mxu0
        %868 = vdwg.mxu0
        %v869 = vrcp.pop %v685
        %v870 = vmul.f32 %v807, %v869
        %v871 = vrcp.pop %v687
        %v872 = vmul.f32 %v810, %v871
        %v873 = vrcp.pop %v689
        %v874 = vmul.f32 %v815, %v873
        %v875 = vrcp.pop %v691
        %v876 = vmul.f32 %v818, %v875
        %v877 = vrcp.pop %v693
        %v878 = vmul.f32 %v823, %v877
        %v879 = vrcp.pop %v695
        %v880 = vmul.f32 %v826, %v879
        %v881 = vrcp.pop %v697
        %v882 = vmul.f32 %v831, %v881
        %v883 = vrcp.pop %v699
        %v884 = vmul.f32 %v834, %v883
        %v885 = vrcp.pop %v701
        %v886 = vmul.f32 %v839, %v885
        %v887 = vrcp.pop %v703
        %v888 = vmul.f32 %v842, %v887
        %v889 = vrcp.pop %v705
        %v890 = vmul.f32 %v847, %v889
        %v891 = vrcp.pop %v707
        %v892 = vmul.f32 %v850, %v891
        %v893 = vrcp.pop %v709
        %v894 = vmul.f32 %v855, %v893
        %v895 = vrcp.pop %v711
        %v896 = vmul.f32 %v858, %v895
        %v897 = vrcp.pop %v713
        %v898 = vmul.f32 %v863, %v897
        %v899 = vrcp.pop %v715
        %v900 = vmul.f32 %v866, %v899
        %901 = vrot.lane.b32.xlu0 %v394, 64
        %v902 = vpop.permute.xlu0 %901
        %903 = vrot.lane.b32.xlu0 %v395, 64
        %v904 = vpop.permute.xlu0 %903
        %905 = vrot.lane.b32.xlu0 %v396, 64
        %v906 = vpop.permute.xlu0 %905
        %907 = vrot.lane.b32.xlu0 %v397, 64
        %v908 = vpop.permute.xlu0 %907
        %909 = vrot.lane.b32.xlu0 %v398, 64
        %v910 = vpop.permute.xlu0 %909
        %911 = vrot.lane.b32.xlu0 %v399, 64
        %v912 = vpop.permute.xlu0 %911
        %913 = vrot.lane.b32.xlu0 %v400, 64
        %v914 = vpop.permute.xlu0 %913
        %915 = vrot.lane.b32.xlu0 %v401, 64
        %v916 = vpop.permute.xlu0 %915
        %917 = vrot.lane.b32.xlu0 %v434, 64
        %v918 = vpop.permute.xlu0 %917
        %919 = vrot.lane.b32.xlu0 %v435, 64
        %v920 = vpop.permute.xlu0 %919
        %921 = vrot.lane.b32.xlu0 %v436, 64
        %v922 = vpop.permute.xlu0 %921
        %923 = vrot.lane.b32.xlu0 %v437, 64
        %v924 = vpop.permute.xlu0 %923
        %925 = vrot.lane.b32.xlu0 %v438, 64
        %v926 = vpop.permute.xlu0 %925
        %927 = vrot.lane.b32.xlu0 %v439, 64
        %v928 = vpop.permute.xlu0 %927
        %929 = vrot.lane.b32.xlu0 %v440, 64
        %v930 = vpop.permute.xlu0 %929
        %931 = vrot.lane.b32.xlu0 %v441, 64
        %v932 = vpop.permute.xlu0 %931
        %v934 = vsel %vm442, %v902, 0
        %v937 = vsel %vm442, %v904, 0
        %v940 = vsel %vm442, %v906, 0
        %v943 = vsel %vm442, %v908, 0
        %v946 = vsel %vm442, %v910, 0
        %v949 = vsel %vm442, %v912, 0
        %v952 = vsel %vm442, %v914, 0
        %v955 = vsel %vm442, %v916, 0
        %v958 = vsel %vm442, %v918, 0
        %v961 = vsel %vm442, %v920, 0
        %v964 = vsel %vm442, %v922, 0
        %v967 = vsel %vm442, %v924, 0
        %v970 = vsel %vm442, %v926, 0
        %v973 = vsel %vm442, %v928, 0
        %v976 = vsel %vm442, %v930, 0
        %v979 = vsel %vm442, %v932, 0
        %981 = vmatprep.subr.bf16.mxu0 0
        %982 = vmatpush1.bf16.xpose.msra.mxu0 %v958
        %983 = vmatprep.subr.bf16.mxu0 0
        %984 = vmatpush1.bf16.xpose.msra.mxu0 %v961
        %985 = vmatprep.subr.bf16.mxu0 0
        %986 = vmatpush1.bf16.xpose.msra.mxu0 %v964
        %987 = vmatprep.subr.bf16.mxu0 0
        %988 = vmatpush1.bf16.xpose.msra.mxu0 %v967
        %989 = vmatprep.subr.bf16.mxu0 0
        %990 = vmatpush1.bf16.xpose.msra.mxu0 %v970
        %991 = vmatprep.subr.bf16.mxu0 0
        %992 = vmatpush1.bf16.xpose.msra.mxu0 %v973
        %993 = vmatprep.subr.bf16.mxu0 0
        %994 = vmatpush1.bf16.xpose.msra.mxu0 %v976
        %995 = vmatprep.subr.bf16.mxu0 0
        %996 = vmatpush1.bf16.xpose.msra.mxu0 %v979
        %997 = vmatprep.subr.bf16.mxu0 0
        %998 = vmatpush1.bf16.xpose.msra.mxu0 0
        %999 = vmatprep.subr.bf16.mxu0 0
        %1000 = vmatpush1.bf16.xpose.msra.mxu0 0
        %1001 = vmatprep.subr.bf16.mxu0 0
        %1002 = vmatpush1.bf16.xpose.msra.mxu0 0
        %1003 = vmatprep.subr.bf16.mxu0 0
        %1004 = vmatpush1.bf16.xpose.msra.mxu0 0
        %1005 = vmatprep.subr.bf16.mxu0 0
        %1006 = vmatpush1.bf16.xpose.msra.mxu0 0
        %1007 = vmatprep.subr.bf16.mxu0 0
        %1008 = vmatpush1.bf16.xpose.msra.mxu0 0
        %1009 = vmatprep.subr.bf16.mxu0 0
        %1010 = vmatpush1.bf16.xpose.msra.mxu0 0
        %1011 = vmatprep.subr.bf16.mxu0 0
        %1012 = vmatpush1.bf16.xpose.msra.mxu0 0
        %1013 = vmatprep.mubr.bf16.mxu0 0
        %1014 = vmatmul.mubr.bf16.gmra.mrb[0].mxu0 %v934
        %v1015 = vpop.f32.mrb[0].mxu0
        %v1016 = vadd.f32 0.0, %v1015
        %v1017 = vpop.f32.mrb[0].mxu0
        %v1018 = vpop.f32.mrb[0].mxu0
        %v1019 = vadd.f32 0.0, %v1018
        %v1020 = vpop.f32.mrb[0].mxu0
        %1021 = vmatprep.mubr.bf16.mxu0 0
        %1022 = vmatmul.mubr.bf16.gmra.mrb[0].mxu0 %v937
        %v1023 = vpop.f32.mrb[0].mxu0
        %v1024 = vadd.f32 0.0, %v1023
        %v1025 = vpop.f32.mrb[0].mxu0
        %v1026 = vpop.f32.mrb[0].mxu0
        %v1027 = vadd.f32 0.0, %v1026
        %v1028 = vpop.f32.mrb[0].mxu0
        %1029 = vmatprep.mubr.bf16.mxu0 0
        %1030 = vmatmul.mubr.bf16.gmra.mrb[0].mxu0 %v940
        %v1031 = vpop.f32.mrb[0].mxu0
        %v1032 = vadd.f32 0.0, %v1031
        %v1033 = vpop.f32.mrb[0].mxu0
        %v1034 = vpop.f32.mrb[0].mxu0
        %v1035 = vadd.f32 0.0, %v1034
        %v1036 = vpop.f32.mrb[0].mxu0
        %1037 = vmatprep.mubr.bf16.mxu0 0
        %1038 = vmatmul.mubr.bf16.gmra.mrb[0].mxu0 %v943
        %v1039 = vpop.f32.mrb[0].mxu0
        %v1040 = vadd.f32 0.0, %v1039
        %v1041 = vpop.f32.mrb[0].mxu0
        %v1042 = vpop.f32.mrb[0].mxu0
        %v1043 = vadd.f32 0.0, %v1042
        %v1044 = vpop.f32.mrb[0].mxu0
        %1045 = vmatprep.mubr.bf16.mxu0 0
        %1046 = vmatmul.mubr.bf16.gmra.mrb[0].mxu0 %v946
        %v1047 = vpop.f32.mrb[0].mxu0
        %v1048 = vadd.f32 0.0, %v1047
        %v1049 = vpop.f32.mrb[0].mxu0
        %v1050 = vpop.f32.mrb[0].mxu0
        %v1051 = vadd.f32 0.0, %v1050
        %v1052 = vpop.f32.mrb[0].mxu0
        %1053 = vmatprep.mubr.bf16.mxu0 0
        %1054 = vmatmul.mubr.bf16.gmra.mrb[0].mxu0 %v949
        %v1055 = vpop.f32.mrb[0].mxu0
        %v1056 = vadd.f32 0.0, %v1055
        %v1057 = vpop.f32.mrb[0].mxu0
        %v1058 = vpop.f32.mrb[0].mxu0
        %v1059 = vadd.f32 0.0, %v1058
        %v1060 = vpop.f32.mrb[0].mxu0
        %1061 = vmatprep.mubr.bf16.mxu0 0
        %1062 = vmatmul.mubr.bf16.gmra.mrb[0].mxu0 %v952
        %v1063 = vpop.f32.mrb[0].mxu0
        %v1064 = vadd.f32 0.0, %v1063
        %v1065 = vpop.f32.mrb[0].mxu0
        %v1066 = vpop.f32.mrb[0].mxu0
        %v1067 = vadd.f32 0.0, %v1066
        %v1068 = vpop.f32.mrb[0].mxu0
        %1069 = vmatprep.mubr.bf16.mxu0 0
        %1070 = vmatmul.mubr.bf16.gmra.mrb[0].mxu0 %v955
        %v1071 = vpop.f32.mrb[0].mxu0
        %v1072 = vadd.f32 0.0, %v1071
        %v1073 = vpop.f32.mrb[0].mxu0
        %v1074 = vpop.f32.mrb[0].mxu0
        %v1075 = vadd.f32 0.0, %v1074
        %v1076 = vpop.f32.mrb[0].mxu0
        %1077 = vdwg.mxu0
        %v1078 = vmul.f32 %v1016, 0.125
        %v1079 = vmul.f32 %v1019, 0.125
        %v1080 = vmul.f32 %v1024, 0.125
        %v1081 = vmul.f32 %v1027, 0.125
        %v1082 = vmul.f32 %v1032, 0.125
        %v1083 = vmul.f32 %v1035, 0.125
        %v1084 = vmul.f32 %v1040, 0.125
        %v1085 = vmul.f32 %v1043, 0.125
        %v1086 = vmul.f32 %v1048, 0.125
        %v1087 = vmul.f32 %v1051, 0.125
        %v1088 = vmul.f32 %v1056, 0.125
        %v1089 = vmul.f32 %v1059, 0.125
        %v1090 = vmul.f32 %v1064, 0.125
        %v1091 = vmul.f32 %v1067, 0.125
        %v1092 = vmul.f32 %v1072, 0.125
        %v1093 = vmul.f32 %v1075, 0.125
        %1094 = vmax.xlane.f32.xlu0 %v1078
        %v1095 = vpop.xlane.xlu0 %1094
        %1096 = vmax.xlane.f32.xlu0 %v1079
        %v1097 = vpop.xlane.xlu0 %1096
        %1098 = vmax.xlane.f32.xlu0 %v1080
        %v1099 = vpop.xlane.xlu0 %1098
        %1100 = vmax.xlane.f32.xlu0 %v1081
        %v1101 = vpop.xlane.xlu0 %1100
        %1102 = vmax.xlane.f32.xlu0 %v1082
        %v1103 = vpop.xlane.xlu0 %1102
        %1104 = vmax.xlane.f32.xlu0 %v1083
        %v1105 = vpop.xlane.xlu0 %1104
        %1106 = vmax.xlane.f32.xlu0 %v1084
        %v1107 = vpop.xlane.xlu0 %1106
        %1108 = vmax.xlane.f32.xlu0 %v1085
        %v1109 = vpop.xlane.xlu0 %1108
        %1110 = vmax.xlane.f32.xlu0 %v1086
        %v1111 = vpop.xlane.xlu0 %1110
        %1112 = vmax.xlane.f32.xlu0 %v1087
        %v1113 = vpop.xlane.xlu0 %1112
        %1114 = vmax.xlane.f32.xlu0 %v1088
        %v1115 = vpop.xlane.xlu0 %1114
        %1116 = vmax.xlane.f32.xlu0 %v1089
        %v1117 = vpop.xlane.xlu0 %1116
        %1118 = vmax.xlane.f32.xlu0 %v1090
        %v1119 = vpop.xlane.xlu0 %1118
        %1120 = vmax.xlane.f32.xlu0 %v1091
        %v1121 = vpop.xlane.xlu0 %1120
        %1122 = vmax.xlane.f32.xlu0 %v1092
        %v1123 = vpop.xlane.xlu0 %1122
        %1124 = vmax.xlane.f32.xlu0 %v1093
        %v1125 = vpop.xlane.xlu0 %1124
        %v1126 = vsub.f32 %v1078, %v1095
        %v1127 = vsub.f32 %v1079, %v1097
        %v1128 = vsub.f32 %v1080, %v1099
        %v1129 = vsub.f32 %v1081, %v1101
        %v1130 = vsub.f32 %v1082, %v1103
        %v1131 = vsub.f32 %v1083, %v1105
        %v1132 = vsub.f32 %v1084, %v1107
        %v1133 = vsub.f32 %v1085, %v1109
        %v1134 = vsub.f32 %v1086, %v1111
        %v1135 = vsub.f32 %v1087, %v1113
        %v1136 = vsub.f32 %v1088, %v1115
        %v1137 = vsub.f32 %v1089, %v1117
        %v1138 = vsub.f32 %v1090, %v1119
        %v1139 = vsub.f32 %v1091, %v1121
        %v1140 = vsub.f32 %v1092, %v1123
        %v1141 = vsub.f32 %v1093, %v1125
        %v1142 = vmul.f32 %v1126, 1.442695
        %v1143 = vpow.pop %v1142
        %v1144 = vmul.f32 %v1127, 1.442695
        %v1145 = vpow.pop %v1144
        %v1146 = vmul.f32 %v1128, 1.442695
        %v1147 = vpow.pop %v1146
        %v1148 = vmul.f32 %v1129, 1.442695
        %v1149 = vpow.pop %v1148
        %v1150 = vmul.f32 %v1130, 1.442695
        %v1151 = vpow.pop %v1150
        %v1152 = vmul.f32 %v1131, 1.442695
        %v1153 = vpow.pop %v1152
        %v1154 = vmul.f32 %v1132, 1.442695
        %v1155 = vpow.pop %v1154
        %v1156 = vmul.f32 %v1133, 1.442695
        %v1157 = vpow.pop %v1156
        %v1158 = vmul.f32 %v1134, 1.442695
        %v1159 = vpow.pop %v1158
        %v1160 = vmul.f32 %v1135, 1.442695
        %v1161 = vpow.pop %v1160
        %v1162 = vmul.f32 %v1136, 1.442695
        %v1163 = vpow.pop %v1162
        %v1164 = vmul.f32 %v1137, 1.442695
        %v1165 = vpow.pop %v1164
        %v1166 = vmul.f32 %v1138, 1.442695
        %v1167 = vpow.pop %v1166
        %v1168 = vmul.f32 %v1139, 1.442695
        %v1169 = vpow.pop %v1168
        %v1170 = vmul.f32 %v1140, 1.442695
        %v1171 = vpow.pop %v1170
        %v1172 = vmul.f32 %v1141, 1.442695
        %v1173 = vpow.pop %v1172
        %1174 = vadd.xlane.f32.xlu0 %v1143
        %v1175 = vpop.xlane.xlu0 %1174
        %1176 = vadd.xlane.f32.xlu0 %v1145
        %v1177 = vpop.xlane.xlu0 %1176
        %1178 = vadd.xlane.f32.xlu0 %v1147
        %v1179 = vpop.xlane.xlu0 %1178
        %1180 = vadd.xlane.f32.xlu0 %v1149
        %v1181 = vpop.xlane.xlu0 %1180
        %1182 = vadd.xlane.f32.xlu0 %v1151
        %v1183 = vpop.xlane.xlu0 %1182
        %1184 = vadd.xlane.f32.xlu0 %v1153
        %v1185 = vpop.xlane.xlu0 %1184
        %1186 = vadd.xlane.f32.xlu0 %v1155
        %v1187 = vpop.xlane.xlu0 %1186
        %1188 = vadd.xlane.f32.xlu0 %v1157
        %v1189 = vpop.xlane.xlu0 %1188
        %1190 = vadd.xlane.f32.xlu0 %v1159
        %v1191 = vpop.xlane.xlu0 %1190
        %1192 = vadd.xlane.f32.xlu0 %v1161
        %v1193 = vpop.xlane.xlu0 %1192
        %1194 = vadd.xlane.f32.xlu0 %v1163
        %v1195 = vpop.xlane.xlu0 %1194
        %1196 = vadd.xlane.f32.xlu0 %v1165
        %v1197 = vpop.xlane.xlu0 %1196
        %1198 = vadd.xlane.f32.xlu0 %v1167
        %v1199 = vpop.xlane.xlu0 %1198
        %1200 = vadd.xlane.f32.xlu0 %v1169
        %v1201 = vpop.xlane.xlu0 %1200
        %1202 = vadd.xlane.f32.xlu0 %v1171
        %v1203 = vpop.xlane.xlu0 %1202
        %1204 = vadd.xlane.f32.xlu0 %v1173
        %v1205 = vpop.xlane.xlu0 %1204
        %v1206 = vpack.c.bf16 %v1145, %v1143
        %v1207 = vpack.c.bf16 %v1149, %v1147
        %v1208 = vpack.c.bf16 %v1153, %v1151
        %v1209 = vpack.c.bf16 %v1157, %v1155
        %v1210 = vpack.c.bf16 %v1161, %v1159
        %v1211 = vpack.c.bf16 %v1165, %v1163
        %v1212 = vpack.c.bf16 %v1169, %v1167
        %v1213 = vpack.c.bf16 %v1173, %v1171
        %1214 = vrot.lane.b32.xlu0 %v756, 64
        %v1215 = vpop.permute.xlu0 %1214
        %1216 = vrot.lane.b32.xlu0 %v757, 64
        %v1217 = vpop.permute.xlu0 %1216
        %1218 = vrot.lane.b32.xlu0 %v758, 64
        %v1219 = vpop.permute.xlu0 %1218
        %1220 = vrot.lane.b32.xlu0 %v759, 64
        %v1221 = vpop.permute.xlu0 %1220
        %1222 = vrot.lane.b32.xlu0 %v760, 64
        %v1223 = vpop.permute.xlu0 %1222
        %1224 = vrot.lane.b32.xlu0 %v761, 64
        %v1225 = vpop.permute.xlu0 %1224
        %1226 = vrot.lane.b32.xlu0 %v762, 64
        %v1227 = vpop.permute.xlu0 %1226
        %1228 = vrot.lane.b32.xlu0 %v763, 64
        %v1229 = vpop.permute.xlu0 %1228
        %1238 = vmatprep.subr.bf16.mxu0 0
        %1239 = vmatpush1.bf16.msra.mxu0 %v1215
        %1240 = vmatprep.subr.bf16.mxu0 0
        %1241 = vmatpush1.bf16.msra.mxu0 %v1217
        %1242 = vmatprep.subr.bf16.mxu0 0
        %1243 = vmatpush1.bf16.msra.mxu0 %v1219
        %1244 = vmatprep.subr.bf16.mxu0 0
        %1245 = vmatpush1.bf16.msra.mxu0 %v1221
        %1246 = vmatprep.subr.bf16.mxu0 0
        %1247 = vmatpush1.bf16.msra.mxu0 %v1223
        %1248 = vmatprep.subr.bf16.mxu0 0
        %1249 = vmatpush1.bf16.msra.mxu0 %v1225
        %1250 = vmatprep.subr.bf16.mxu0 0
        %1251 = vmatpush1.bf16.msra.mxu0 %v1227
        %1252 = vmatprep.subr.bf16.mxu0 0
        %1253 = vmatpush1.bf16.msra.mxu0 %v1229
        %1254 = vmatprep.subr.bf16.mxu0 0
        %1255 = vmatpush1.bf16.msra.mxu0 0
        %1256 = vmatprep.subr.bf16.mxu0 0
        %1257 = vmatpush1.bf16.msra.mxu0 0
        %1258 = vmatprep.subr.bf16.mxu0 0
        %1259 = vmatpush1.bf16.msra.mxu0 0
        %1260 = vmatprep.subr.bf16.mxu0 0
        %1261 = vmatpush1.bf16.msra.mxu0 0
        %1262 = vmatprep.subr.bf16.mxu0 0
        %1263 = vmatpush1.bf16.msra.mxu0 0
        %1264 = vmatprep.subr.bf16.mxu0 0
        %1265 = vmatpush1.bf16.msra.mxu0 0
        %1266 = vmatprep.subr.bf16.mxu0 0
        %1267 = vmatpush1.bf16.msra.mxu0 0
        %1268 = vmatprep.subr.bf16.mxu0 0
        %1269 = vmatpush1.bf16.msra.mxu0 0
        %1270 = vmatprep.mubr.bf16.mxu0 0
        %1271 = vmatmul.mubr.bf16.gmra.mrb[0].mxu0 %v1206
        %v1272 = vpop.f32.mrb[0].mxu0
        %v1273 = vadd.f32 0.0, %v1272
        %v1274 = vpop.f32.mrb[0].mxu0
        %v1275 = vpop.f32.mrb[0].mxu0
        %v1276 = vadd.f32 0.0, %v1275
        %v1277 = vpop.f32.mrb[0].mxu0
        %1278 = vmatprep.mubr.bf16.mxu0 0
        %1279 = vmatmul.mubr.bf16.gmra.mrb[0].mxu0 %v1207
        %v1280 = vpop.f32.mrb[0].mxu0
        %v1281 = vadd.f32 0.0, %v1280
        %v1282 = vpop.f32.mrb[0].mxu0
        %v1283 = vpop.f32.mrb[0].mxu0
        %v1284 = vadd.f32 0.0, %v1283
        %v1285 = vpop.f32.mrb[0].mxu0
        %1286 = vmatprep.mubr.bf16.mxu0 0
        %1287 = vmatmul.mubr.bf16.gmra.mrb[0].mxu0 %v1208
        %v1288 = vpop.f32.mrb[0].mxu0
        %v1289 = vadd.f32 0.0, %v1288
        %v1290 = vpop.f32.mrb[0].mxu0
        %v1291 = vpop.f32.mrb[0].mxu0
        %v1292 = vadd.f32 0.0, %v1291
        %v1293 = vpop.f32.mrb[0].mxu0
        %1294 = vmatprep.mubr.bf16.mxu0 0
        %1295 = vmatmul.mubr.bf16.gmra.mrb[0].mxu0 %v1209
        %v1296 = vpop.f32.mrb[0].mxu0
        %v1297 = vadd.f32 0.0, %v1296
        %v1298 = vpop.f32.mrb[0].mxu0
        %v1299 = vpop.f32.mrb[0].mxu0
        %v1300 = vadd.f32 0.0, %v1299
        %v1301 = vpop.f32.mrb[0].mxu0
        %1302 = vmatprep.mubr.bf16.mxu0 0
        %1303 = vmatmul.mubr.bf16.gmra.mrb[0].mxu0 %v1210
        %v1304 = vpop.f32.mrb[0].mxu0
        %v1305 = vadd.f32 0.0, %v1304
        %v1306 = vpop.f32.mrb[0].mxu0
        %v1307 = vpop.f32.mrb[0].mxu0
        %v1308 = vadd.f32 0.0, %v1307
        %v1309 = vpop.f32.mrb[0].mxu0
        %1310 = vmatprep.mubr.bf16.mxu0 0
        %1311 = vmatmul.mubr.bf16.gmra.mrb[0].mxu0 %v1211
        %v1312 = vpop.f32.mrb[0].mxu0
        %v1313 = vadd.f32 0.0, %v1312
        %v1314 = vpop.f32.mrb[0].mxu0
        %v1315 = vpop.f32.mrb[0].mxu0
        %v1316 = vadd.f32 0.0, %v1315
        %v1317 = vpop.f32.mrb[0].mxu0
        %1318 = vmatprep.mubr.bf16.mxu0 0
        %1319 = vmatmul.mubr.bf16.gmra.mrb[0].mxu0 %v1212
        %v1320 = vpop.f32.mrb[0].mxu0
        %v1321 = vadd.f32 0.0, %v1320
        %v1322 = vpop.f32.mrb[0].mxu0
        %v1323 = vpop.f32.mrb[0].mxu0
        %v1324 = vadd.f32 0.0, %v1323
        %v1325 = vpop.f32.mrb[0].mxu0
        %1326 = vmatprep.mubr.bf16.mxu0 0
        %1327 = vmatmul.mubr.bf16.gmra.mrb[0].mxu0 %v1213
        %v1328 = vpop.f32.mrb[0].mxu0
        %v1329 = vadd.f32 0.0, %v1328
        %v1330 = vpop.f32.mrb[0].mxu0
        %v1331 = vpop.f32.mrb[0].mxu0
        %v1332 = vadd.f32 0.0, %v1331
        %v1333 = vpop.f32.mrb[0].mxu0
        %1334 = vdwg.mxu0
        %v1335 = vrcp.pop %v1175
        %v1336 = vmul.f32 %v1273, %v1335
        %v1337 = vrcp.pop %v1177
        %v1338 = vmul.f32 %v1276, %v1337
        %v1339 = vrcp.pop %v1179
        %v1340 = vmul.f32 %v1281, %v1339
        %v1341 = vrcp.pop %v1181
        %v1342 = vmul.f32 %v1284, %v1341
        %v1343 = vrcp.pop %v1183
        %v1344 = vmul.f32 %v1289, %v1343
        %v1345 = vrcp.pop %v1185
        %v1346 = vmul.f32 %v1292, %v1345
        %v1347 = vrcp.pop %v1187
        %v1348 = vmul.f32 %v1297, %v1347
        %v1349 = vrcp.pop %v1189
        %v1350 = vmul.f32 %v1300, %v1349
        %v1351 = vrcp.pop %v1191
        %v1352 = vmul.f32 %v1305, %v1351
        %v1353 = vrcp.pop %v1193
        %v1354 = vmul.f32 %v1308, %v1353
        %v1355 = vrcp.pop %v1195
        %v1356 = vmul.f32 %v1313, %v1355
        %v1357 = vrcp.pop %v1197
        %v1358 = vmul.f32 %v1316, %v1357
        %v1359 = vrcp.pop %v1199
        %v1360 = vmul.f32 %v1321, %v1359
        %v1361 = vrcp.pop %v1201
        %v1362 = vmul.f32 %v1324, %v1361
        %v1363 = vrcp.pop %v1203
        %v1364 = vmul.f32 %v1329, %v1363
        %v1365 = vrcp.pop %v1205
        %v1366 = vmul.f32 %v1332, %v1365
        %1383 = vrot.lane.b32.xlu0 %v1336, 64
        %v1384 = vpop.permute.xlu0 %1383
        %1385 = vrot.lane.b32.xlu0 %v1338, 64
        %v1386 = vpop.permute.xlu0 %1385
        %1387 = vrot.lane.b32.xlu0 %v1340, 64
        %v1388 = vpop.permute.xlu0 %1387
        %1389 = vrot.lane.b32.xlu0 %v1342, 64
        %v1390 = vpop.permute.xlu0 %1389
        %1391 = vrot.lane.b32.xlu0 %v1344, 64
        %v1392 = vpop.permute.xlu0 %1391
        %1393 = vrot.lane.b32.xlu0 %v1346, 64
        %v1394 = vpop.permute.xlu0 %1393
        %1395 = vrot.lane.b32.xlu0 %v1348, 64
        %v1396 = vpop.permute.xlu0 %1395
        %1397 = vrot.lane.b32.xlu0 %v1350, 64
        %v1398 = vpop.permute.xlu0 %1397
        %1399 = vrot.lane.b32.xlu0 %v1352, 64
        %v1400 = vpop.permute.xlu0 %1399
        %1401 = vrot.lane.b32.xlu0 %v1354, 64
        %v1402 = vpop.permute.xlu0 %1401
        %1403 = vrot.lane.b32.xlu0 %v1356, 64
        %v1404 = vpop.permute.xlu0 %1403
        %1405 = vrot.lane.b32.xlu0 %v1358, 64
        %v1406 = vpop.permute.xlu0 %1405
        %1407 = vrot.lane.b32.xlu0 %v1360, 64
        %v1408 = vpop.permute.xlu0 %1407
        %1409 = vrot.lane.b32.xlu0 %v1362, 64
        %v1410 = vpop.permute.xlu0 %1409
        %1411 = vrot.lane.b32.xlu0 %v1364, 64
        %v1412 = vpop.permute.xlu0 %1411
        %1413 = vrot.lane.b32.xlu0 %v1366, 64
        %v1414 = vpop.permute.xlu0 %1413
        %v1431 = vsel %vm442, %v870, %v1384
        %v1432 = vsel %vm442, %v872, %v1386
        %v1433 = vsel %vm442, %v874, %v1388
        %v1434 = vsel %vm442, %v876, %v1390
        %v1435 = vsel %vm442, %v878, %v1392
        %v1436 = vsel %vm442, %v880, %v1394
        %v1437 = vsel %vm442, %v882, %v1396
        %v1438 = vsel %vm442, %v884, %v1398
        %v1439 = vsel %vm442, %v886, %v1400
        %v1440 = vsel %vm442, %v888, %v1402
        %v1441 = vsel %vm442, %v890, %v1404
        %v1442 = vsel %vm442, %v892, %v1406
        %v1443 = vsel %vm442, %v894, %v1408
        %v1444 = vsel %vm442, %v896, %v1410
        %v1445 = vsel %vm442, %v898, %v1412
        %v1446 = vsel %vm442, %v900, %v1414
        %v1447 = vpack.c.bf16 %v1432, %v1431
        %v1448 = vpack.c.bf16 %v1434, %v1433
        %v1449 = vpack.c.bf16 %v1436, %v1435
        %v1450 = vpack.c.bf16 %v1438, %v1437
        %v1451 = vpack.c.bf16 %v1440, %v1439
        %v1452 = vpack.c.bf16 %v1442, %v1441
        %v1453 = vpack.c.bf16 %v1444, %v1443
        %v1454 = vpack.c.bf16 %v1446, %v1445
        %v1463 = vunpack.c.l.b16 %v1447
        %v1464 = vunpack.c.h.b16 %v1447
        %v1465 = vunpack.c.l.b16 %v1448
        %v1466 = vunpack.c.h.b16 %v1448
        %v1467 = vunpack.c.l.b16 %v1449
        %v1468 = vunpack.c.h.b16 %v1449
        %v1469 = vunpack.c.l.b16 %v1450
        %v1470 = vunpack.c.h.b16 %v1450
        %v1471 = vunpack.c.l.b16 %v1451
        %v1472 = vunpack.c.h.b16 %v1451
        %v1473 = vunpack.c.l.b16 %v1452
        %v1474 = vunpack.c.h.b16 %v1452
        %v1475 = vunpack.c.l.b16 %v1453
        %v1476 = vunpack.c.h.b16 %v1453
        %v1477 = vunpack.c.l.b16 %v1454
        %v1478 = vunpack.c.h.b16 %v1454
        %v1479 = vpack.c.b16 %v1463, %v1463
        %v1480 = vpack.c.b16 %v1464, %v1464
        %v1481 = vpack.c.b16 %v1465, %v1465
        %v1482 = vpack.c.b16 %v1466, %v1466
        %v1483 = vpack.c.b16 %v1467, %v1467
        %v1484 = vpack.c.b16 %v1468, %v1468
        %v1485 = vpack.c.b16 %v1469, %v1469
        %v1486 = vpack.c.b16 %v1470, %v1470
        %v1487 = vpack.c.b16 %v1471, %v1471
        %v1488 = vpack.c.b16 %v1472, %v1472
        %v1489 = vpack.c.b16 %v1473, %v1473
        %v1490 = vpack.c.b16 %v1474, %v1474
        %v1491 = vpack.c.b16 %v1475, %v1475
        %v1492 = vpack.c.b16 %v1476, %v1476
        %v1493 = vpack.c.b16 %v1477, %v1477
        %v1494 = vpack.c.b16 %v1478, %v1478
        %1511 = vst [vmem:[%s308] sm:$0xf] %v1479
        %1512 = vst [vmem:[%s308 + $0x4] sm:$0xf] %v1480
        %1513 = vst [vmem:[%s308 + $0x8] sm:$0xf] %v1481
        %1514 = vst [vmem:[%s308 + $0xc] sm:$0xf] %v1482
        %1515 = vst [vmem:[%s308 + $0x10] sm:$0xf] %v1483
        %1516 = vst [vmem:[%s308 + $0x14] sm:$0xf] %v1484
        %1517 = vst [vmem:[%s308 + $0x18] sm:$0xf] %v1485
        %1518 = vst [vmem:[%s308 + $0x1c] sm:$0xf] %v1486
        %1519 = vst [vmem:[%s308 + $0x20] sm:$0xf] %v1487
        %1520 = vst [vmem:[%s308 + $0x24] sm:$0xf] %v1488
        %1521 = vst [vmem:[%s308 + $0x28] sm:$0xf] %v1489
        %1522 = vst [vmem:[%s308 + $0x2c] sm:$0xf] %v1490
        %1523 = vst [vmem:[%s308 + $0x30] sm:$0xf] %v1491
        %1524 = vst [vmem:[%s308 + $0x34] sm:$0xf] %v1492
        %1525 = vst [vmem:[%s308 + $0x38] sm:$0xf] %v1493
        %1526 = vst [vmem:[%s308 + $0x3c] sm:$0xf] %v1494
        %s1527 = sand.u32 %s144, 1
        %s1528 = scalar_lea.sflag [#allocation4], %s1527
        %s1529 = sand.u32 %s144, 1
        %s1530 = smul.addr %s1529, 64
        %s1531 = scalar_lea.vmem [#allocation8], %s1530
        // Predicated region
        $region45: #{tpu_custom_call.1} parent=31 // pred_check
          %p1532 = pneg %p154
        $region46: #{tpu_custom_call.1} parent=31 // pred_check_branch
          %1534 = sbr.rel (%p1532) target = $region48
        $region47: #{tpu_custom_call.1} parent=31 // pred_region
          %s1535 = smul.u32 16, %s30
          %s1537 = ssub.s32 1024, 1024
          %1538 = vsyncadd %s1528, %s1537
          %s1539 = smul.addr %s1535, 2
          %s1540 = sadd.s32 %s29, %s1539
          %s1541 = smul.addr %s28, 32
          %s1542 = sadd.s32 %s1540, %s1541
          %s1543 = smul.addr %s1542, 64
          %s1544 = scalar_lea.hbm %s3, %s1543
          %s1545 = sshll.u32 %s1531, 4
          %s1546 = int_to_ptr.vmem [resolvable:$true] %s1545
          %1551 = dma.vmem_to_hbm [thread:$0]  %s1546, 1024, %s1544, %s1528, 64, 128, 4
        $region48: #{tpu_custom_call.1} parent=31 // pred_fallthru
          _
      $region32: #{tpu_custom_call.1} parent=5 // pred_fallthru
        _
      %p1552 = scmp.le.s32.totalorder 2, %s18
      // Predicated region
      $region49: #{tpu_custom_call.1} parent=5 // pred_check
        %p1553 = pneg %p1552
      $region50: #{tpu_custom_call.1} parent=5 // pred_check_branch
        %1555 = sbr.rel (%p1553) target = $region52
      $region51: #{tpu_custom_call.1} parent=5 // pred_region
        %s1556 = ssub.s32 %s18, 2
        // Predicated region
        $region53: #{tpu_custom_call.1} parent=51 // pred_check
          %p1557 = pneg %p160
        $region54: #{tpu_custom_call.1} parent=51 // pred_check_branch
          %1559 = sbr.rel (%p1557) target = $region56
        $region55: #{tpu_custom_call.1} parent=51 // pred_region
          %s1560 = sand.u32 %s145, 1
          %s1561 = scalar_lea.sflag [#allocation4], %s1560
          %s1562 = sand.u32 %s145, 1
          %s1563 = smul.addr %s1562, 64
          %s1564 = scalar_lea.vmem [#allocation8], %s1563
          %1565 = dma.done %s1561, 1024
        $region56: #{tpu_custom_call.1} parent=51 // pred_fallthru
          _
      $region52: #{tpu_custom_call.1} parent=5 // pred_fallthru
        _
    $region6: #{tpu_custom_call.1} parent=1 // loop_footer
      %s22 = sadd.s32 1, %s18
    $region7: #{tpu_custom_call.1} parent=1 // loop_footer_branch
      %17 = sbr.rel target = $region3
    $region8: #{tpu_custom_call.1} parent=1 // loop_exit
      _
    %1566 = vsyncpa [#allocation3], 1
    %s1567 = scalar_lea.sflag [#allocation3], 1
    %1568 = vsyncpa %s1567, 1
    %1569 = vsyncpa [#allocation6], 1
    %s1570 = scalar_lea.sflag [#allocation6], 1
    %1571 = vsyncpa %s1570, 1
    %1572 = vsyncpa [#allocation4], 1
    %s1573 = scalar_lea.sflag [#allocation4], 1
    %1574 = vsyncpa %s1573, 1

</llo_original>
